<compile_context>
chip_gen: v5e
topology: v5e:2x2
jax: 0.10.0
libtpu: 0.0.40
codegen_flags: <defaults>
</compile_context>

<pallas_src>
import functools

import jax
import jax.numpy as jnp
from jax import lax
from jax.experimental import pallas as pl
from jax.experimental.pallas import tpu as pltpu

LN_EPS = 1e-5  # matches torch.nn.LayerNorm default

H1, H2, H3 = 512, 512, 256  # hidden sizes from the PyTorch module

# static offsets into the packed [1, 3968] bias/LN vector (all lane-aligned)
_OFF_B1, _OFF_G1, _OFF_BE1 = 0, 512, 1024
_OFF_B2, _OFF_G2, _OFF_BE2 = 1536, 2048, 2560
_OFF_B3, _OFF_G3, _OFF_BE3 = 3072, 3328, 3584
_OFF_B4 = 3840
_VEC_LEN = 3968


def _round_up(n, m):
    return ((n + m - 1) // m) * m


@functools.lru_cache(maxsize=1)
def _hw_flags():
    """(num_tensorcores_sharing_grid, use_bf16_elementwise_epilogue)."""
    try:
        kind = jax.devices()[0].device_kind.lower()
    except Exception:
        kind = ""
    n_cores = 2 if "v7" in kind else 1
    bf16_ep = ("v6" in kind) or ("v7" in kind)  # bf16 VALU present
    return n_cores, bf16_ep


def _choose_batch_tile(batch, n_cores, tb_max=512):
    """Batch tile: big enough to amortize per-step overhead, but (on multi-TC
    chips) chosen so the 'parallel' grid axis spans all TensorCores."""
    if batch <= 8 * n_cores:
        return _round_up(max(batch, 1), 8)
    tiles = max(n_cores, -(-batch // tb_max))        # enough tiles to cap TB
    tiles = -(-tiles // n_cores) * n_cores           # multiple of n_cores
    return _round_up(-(-batch // tiles), 8)


def _ln_relu(h, gamma, beta, ew_dtype):
    """LayerNorm over last dim + ReLU. Reductions/rsqrt in f32; the affine +
    ReLU run in `ew_dtype` (bf16 on v6e/v7x, f32 on v5e)."""
    mu = jnp.mean(h, axis=-1, keepdims=True)
    hc = h - mu                                       # reused for var & norm
    var = jnp.mean(hc * hc, axis=-1, keepdims=True)
    hn = hc * lax.rsqrt(var + LN_EPS)                 # rsqrt -> EUP slot
    if ew_dtype != jnp.float32:
        hn = hn.astype(ew_dtype)
        gamma = gamma.astype(ew_dtype)
        beta = beta.astype(ew_dtype)
    return jnp.maximum(hn * gamma + beta, 0.0)


def actor_kernel(x_ref, w1_ref, w2_ref, w3_ref, w4_ref, vec_ref, o_ref,
                 *, bf16_epilogue):
    ew = jnp.bfloat16 if bf16_epilogue else jnp.float32
    ap = o_ref.shape[-1]                              # true action_dim (unpadded)

    # static, lane-aligned slices through the packed params ref
    b1, g1, be1 = (vec_ref[:, _OFF_B1:_OFF_G1], vec_ref[:, _OFF_G1:_OFF_BE1],
                   vec_ref[:, _OFF_BE1:_OFF_B2])
    b2, g2, be2 = (vec_ref[:, _OFF_B2:_OFF_G2], vec_ref[:, _OFF_G2:_OFF_BE2],
                   vec_ref[:, _OFF_BE2:_OFF_B3])
    b3, g3, be3 = (vec_ref[:, _OFF_B3:_OFF_G3], vec_ref[:, _OFF_G3:_OFF_BE3],
                   vec_ref[:, _OFF_BE3:_OFF_B4])
    b4 = vec_ref[:, _OFF_B4:_OFF_B4 + ap]

    # Layer 1: Linear(state, 512) + LayerNorm + ReLU
    x = x_ref[...].astype(jnp.bfloat16)
    h = jnp.dot(x, w1_ref[...], preferred_element_type=jnp.float32) + b1
    h = _ln_relu(h, g1, be1, ew)

    # Layer 2: Linear(512, 512) + LayerNorm + ReLU
    h = jnp.dot(h.astype(jnp.bfloat16), w2_ref[...],
                preferred_element_type=jnp.float32) + b2
    h = _ln_relu(h, g2, be2, ew)

    # Layer 3: Linear(512, 256) + LayerNorm + ReLU
    h = jnp.dot(h.astype(jnp.bfloat16), w3_ref[...],
                preferred_element_type=jnp.float32) + b3
    h = _ln_relu(h, g3, be3, ew)

    # Layer 4: Linear(256, action) + Tanh  (tiny lane width -> f32 is fine)
    out = jnp.dot(h.astype(jnp.bfloat16), w4_ref[...],
                  preferred_element_type=jnp.float32) + b4
    o_ref[...] = jnp.tanh(out).astype(o_ref.dtype)


@functools.partial(jax.jit, static_argnames=("action_dim",))
def actor_forward(x, kp, *, action_dim):
    """Fused Actor forward. x: [batch, state_dim] f32 -> [batch, action_dim] f32."""
    batch, state_dim = x.shape
    n_cores, bf16_ep = _hw_flags()

    TB = _choose_batch_tile(batch, n_cores)
    padded_batch = _round_up(batch, TB)

    # only the batch dim is ever padded; feature dims stay unpadded
    xp = x if padded_batch == batch else jnp.pad(x, ((0, padded_batch - batch), (0, 0)))

    grid = (padded_batch // TB,)
    in_specs = [
        pl.BlockSpec((TB, state_dim), lambda i: (i, 0)),       # x tile (pipelined)
        pl.BlockSpec((state_dim, H1), lambda i: (0, 0)),       # w1 (resident)
        pl.BlockSpec((H1, H2), lambda i: (0, 0)),              # w2 (resident)
        pl.BlockSpec((H2, H3), lambda i: (0, 0)),              # w3 (resident)
        pl.BlockSpec((H3, action_dim), lambda i: (0, 0)),      # w4 (resident)
        pl.BlockSpec((1, _VEC_LEN), lambda i: (0, 0)),         # packed biases / LN params
    ]
    out_spec = pl.BlockSpec((TB, action_dim), lambda i: (i, 0))

    out = pl.pallas_call(
        functools.partial(actor_kernel, bf16_epilogue=bf16_ep),
        out_shape=jax.ShapeDtypeStruct((padded_batch, action_dim), jnp.float32),
        grid_spec=pltpu.PrefetchScalarGridSpec(
            num_scalar_prefetch=0,
            grid=grid,
            in_specs=in_specs,
            out_specs=out_spec,
        ),
        compiler_params=pltpu.CompilerParams(
            dimension_semantics=("parallel",),                 # batch tiles across TCs (v7x)
        ),
    )(xp, kp["w1"], kp["w2"], kp["w3"], kp["w4"], kp["vec"])

    return out if padded_batch == batch else out[:batch]


def init_params(key, state_dim, action_dim):
    """Deterministic synthetic f32 parameters (shapes match the PyTorch module)."""
    ks = jax.random.split(key, 8)
    scale = 0.05

    def lin(kw, kb, fan_in, fan_out):
        w = scale * jax.random.normal(kw, (fan_in, fan_out), jnp.float32)
        b = scale * jax.random.normal(kb, (1, fan_out), jnp.float32)
        return w, b

    w1, b1 = lin(ks[0], ks[1], state_dim, H1)
    w2, b2 = lin(ks[2], ks[3], H1, H2)
    w3, b3 = lin(ks[4], ks[5], H2, H3)
    w4, b4 = lin(ks[6], ks[7], H3, action_dim)

    return {
        "w1": w1, "b1": b1,
        "g1": jnp.ones((1, H1), jnp.float32), "be1": jnp.zeros((1, H1), jnp.float32),
        "w2": w2, "b2": b2,
        "g2": jnp.ones((1, H2), jnp.float32), "be2": jnp.zeros((1, H2), jnp.float32),
        "w3": w3, "b3": b3,
        "g3": jnp.ones((1, H3), jnp.float32), "be3": jnp.zeros((1, H3), jnp.float32),
        "w4": w4, "b4": b4,
    }


def pack_params(p, state_dim, action_dim):
    """One-time conversion to the kernel layout: bf16 weights (unpadded) plus a
    single packed f32 vector for all biases / LN params (b4 slot padded to 128
    lanes so every offset stays lane-aligned)."""
    b4_slot = jnp.zeros((1, _VEC_LEN - _OFF_B4), jnp.float32).at[:, :action_dim].set(p["b4"])
    vec = jnp.concatenate(
        [p["b1"], p["g1"], p["be1"],
         p["b2"], p["g2"], p["be2"],
         p["b3"], p["g3"], p["be3"],
         b4_slot], axis=-1)
    assert vec.shape == (1, _VEC_LEN), vec.shape

    return {
        "w1": p["w1"].astype(jnp.bfloat16),
        "w2": p["w2"].astype(jnp.bfloat16),
        "w3": p["w3"].astype(jnp.bfloat16),
        "w4": p["w4"].astype(jnp.bfloat16),
        "vec": vec,
    }


def actor_reference(x, p):
    """Pure-JAX f32 reference of the PyTorch forward for verification."""
    def ln_relu(h, g, b):
        mu = jnp.mean(h, -1, keepdims=True)
        var = jnp.mean((h - mu) ** 2, -1, keepdims=True)
        return jnp.maximum((h - mu) / jnp.sqrt(var + LN_EPS) * g + b, 0.0)

    h = ln_relu(x @ p["w1"] + p["b1"], p["g1"], p["be1"])
    h = ln_relu(h @ p["w2"] + p["b2"], p["g2"], p["be2"])
    h = ln_relu(h @ p["w3"] + p["b3"], p["g3"], p["be3"])
    return jnp.tanh(h @ p["w4"] + p["b4"])


if __name__ == "__main__":
    key = jax.random.PRNGKey(0)
    k_x, k_p = jax.random.split(key)

    batch = 2        # small batch of agents
    state_dim = 32   # flattened observation size (synthetic)
    action_dim = 8   # continuous action size (synthetic)

    x = jax.random.normal(k_x, (batch, state_dim), jnp.float32)
    params = init_params(k_p, state_dim, action_dim)
    kparams = pack_params(params, state_dim, action_dim)

    out = actor_forward(x, kparams, action_dim=action_dim)
    out = jax.block_until_ready(out)

    ref = actor_reference(x, params)
    assert out.shape == (batch, action_dim), out.shape
    # bf16 weights / activations on the MXU (and bf16 epilogue on v6e/v7x)
    # vs f32 reference -> loosened tolerance
    assert jnp.allclose(out, ref, atol=3e-2, rtol=3e-2), "mismatch vs reference"

    print("KERNEL_OK")
</pallas_src>

<mosaic_0001>
module attributes {stable_mosaic.version = 11 : i64} {
  func.func @actor_kernel(%arg0: i32, %arg1: memref<8x32xf32, #tpu.memory_space<vmem>>, %arg2: memref<32x512xbf16, #tpu.memory_space<vmem>>, %arg3: memref<512x512xbf16, #tpu.memory_space<vmem>>, %arg4: memref<512x256xbf16, #tpu.memory_space<vmem>>, %arg5: memref<256x8xbf16, #tpu.memory_space<vmem>>, %arg6: memref<1x3968xf32, #tpu.memory_space<vmem>>, %arg7: memref<8x8xf32, #tpu.memory_space<vmem>>) attributes {dimension_semantics = [#tpu.dimension_semantics<parallel>], iteration_bounds = array<i64: 1>, scalar_prefetch = 0 : i64, scratch_operands = 0 : i64, tpu.core_type = #tpu.core_type<tc>, window_params = [{transform_indices = @transform_0, window_bounds = array<i64: 8, 32>}, {pipeline_mode = #tpu.pipeline_mode<synchronous>, transform_indices = @transform_1, window_bounds = array<i64: 32, 512>}, {pipeline_mode = #tpu.pipeline_mode<synchronous>, transform_indices = @transform_2, window_bounds = array<i64: 512, 512>}, {pipeline_mode = #tpu.pipeline_mode<synchronous>, transform_indices = @transform_3, window_bounds = array<i64: 512, 256>}, {pipeline_mode = #tpu.pipeline_mode<synchronous>, transform_indices = @transform_4, window_bounds = array<i64: 256, 8>}, {pipeline_mode = #tpu.pipeline_mode<synchronous>, transform_indices = @transform_5, window_bounds = array<i64: 1, 3968>}, {transform_indices = @transform_6, window_bounds = array<i64: 8, 8>}]} {
    %c0 = arith.constant 0 : index
    %c0_0 = arith.constant 0 : index
    %0 = vector.load %arg6[%c0, %c0_0] : memref<1x3968xf32, #tpu.memory_space<vmem>>, vector<1x512xf32>
    %c0_1 = arith.constant 0 : index
    %c512 = arith.constant 512 : index
    %1 = vector.load %arg6[%c0_1, %c512] : memref<1x3968xf32, #tpu.memory_space<vmem>>, vector<1x512xf32>
    %c0_2 = arith.constant 0 : index
    %c1024 = arith.constant 1024 : index
    %2 = vector.load %arg6[%c0_2, %c1024] : memref<1x3968xf32, #tpu.memory_space<vmem>>, vector<1x512xf32>
    %c0_3 = arith.constant 0 : index
    %c1536 = arith.constant 1536 : index
    %3 = vector.load %arg6[%c0_3, %c1536] : memref<1x3968xf32, #tpu.memory_space<vmem>>, vector<1x512xf32>
    %c0_4 = arith.constant 0 : index
    %c2048 = arith.constant 2048 : index
    %4 = vector.load %arg6[%c0_4, %c2048] : memref<1x3968xf32, #tpu.memory_space<vmem>>, vector<1x512xf32>
    %c0_5 = arith.constant 0 : index
    %c2560 = arith.constant 2560 : index
    %5 = vector.load %arg6[%c0_5, %c2560] : memref<1x3968xf32, #tpu.memory_space<vmem>>, vector<1x512xf32>
    %c0_6 = arith.constant 0 : index
    %c3072 = arith.constant 3072 : index
    %6 = vector.load %arg6[%c0_6, %c3072] : memref<1x3968xf32, #tpu.memory_space<vmem>>, vector<1x256xf32>
    %c0_7 = arith.constant 0 : index
    %c3328 = arith.constant 3328 : index
    %7 = vector.load %arg6[%c0_7, %c3328] : memref<1x3968xf32, #tpu.memory_space<vmem>>, vector<1x256xf32>
    %c0_8 = arith.constant 0 : index
    %c3584 = arith.constant 3584 : index
    %8 = vector.load %arg6[%c0_8, %c3584] : memref<1x3968xf32, #tpu.memory_space<vmem>>, vector<1x256xf32>
    %c0_9 = arith.constant 0 : index
    %c3840 = arith.constant 3840 : index
    %9 = vector.load %arg6[%c0_9, %c3840] : memref<1x3968xf32, #tpu.memory_space<vmem>>, vector<1x8xf32>
    %c0_10 = arith.constant 0 : index
    %c0_11 = arith.constant 0 : index
    %10 = vector.load %arg1[%c0_10, %c0_11] : memref<8x32xf32, #tpu.memory_space<vmem>>, vector<8x32xf32>
    %11 = arith.truncf %10 : vector<8x32xf32> to vector<8x32xbf16>
    %c0_12 = arith.constant 0 : index
    %c0_13 = arith.constant 0 : index
    %12 = vector.load %arg2[%c0_12, %c0_13] : memref<32x512xbf16, #tpu.memory_space<vmem>>, vector<32x512xbf16>
    %cst = arith.constant dense<0.000000e+00> : vector<8x512xf32>
    %13 = tpu.matmul %11, %12, %cst {dimension_numbers = #tpu.dot_dimension_numbers<[1], [0], [0], [1], [0, 0, 1, 1], [], []>} : vector<8x32xbf16>, vector<32x512xbf16>, vector<8x512xf32> -> vector<8x512xf32>
    %14 = vector.broadcast %0 : vector<1x512xf32> to vector<8x512xf32>
    %15 = arith.addf %13, %14 : vector<8x512xf32>
    %cst_14 = arith.constant dense<0.000000e+00> : vector<8xf32>
    %16 = vector.multi_reduction <add>, %15, %cst_14 [1] : vector<8x512xf32> to vector<8xf32>
    %17 = vector.shape_cast %16 : vector<8xf32> to vector<8x1xf32>
    %cst_15 = arith.constant 5.120000e+02 : f32
    %18 = vector.broadcast %cst_15 : f32 to vector<8x1xf32>
    %19 = arith.divf %17, %18 : vector<8x1xf32>
    %20 = vector.broadcast %19 : vector<8x1xf32> to vector<8x512xf32>
    %21 = arith.subf %15, %20 : vector<8x512xf32>
    %22 = arith.mulf %21, %21 : vector<8x512xf32>
    %cst_16 = arith.constant dense<0.000000e+00> : vector<8xf32>
    %23 = vector.multi_reduction <add>, %22, %cst_16 [1] : vector<8x512xf32> to vector<8xf32>
    %24 = vector.shape_cast %23 : vector<8xf32> to vector<8x1xf32>
    %cst_17 = arith.constant 5.120000e+02 : f32
    %25 = vector.broadcast %cst_17 : f32 to vector<8x1xf32>
    %26 = arith.divf %24, %25 : vector<8x1xf32>
    %cst_18 = arith.constant 9.99999974E-6 : f32
    %27 = vector.broadcast %cst_18 : f32 to vector<8x1xf32>
    %28 = arith.addf %26, %27 : vector<8x1xf32>
    %29 = math.rsqrt %28 : vector<8x1xf32>
    %30 = vector.broadcast %29 : vector<8x1xf32> to vector<8x512xf32>
    %31 = arith.mulf %21, %30 : vector<8x512xf32>
    %32 = vector.broadcast %1 : vector<1x512xf32> to vector<8x512xf32>
    %33 = arith.mulf %31, %32 : vector<8x512xf32>
    %34 = vector.broadcast %2 : vector<1x512xf32> to vector<8x512xf32>
    %35 = arith.addf %33, %34 : vector<8x512xf32>
    %cst_19 = arith.constant 0.000000e+00 : f32
    %36 = vector.broadcast %cst_19 : f32 to vector<8x512xf32>
    %37 = arith.maximumf %35, %36 : vector<8x512xf32>
    %38 = arith.truncf %37 : vector<8x512xf32> to vector<8x512xbf16>
    %c0_20 = arith.constant 0 : index
    %c0_21 = arith.constant 0 : index
    %39 = vector.load %arg3[%c0_20, %c0_21] : memref<512x512xbf16, #tpu.memory_space<vmem>>, vector<512x512xbf16>
    %cst_22 = arith.constant dense<0.000000e+00> : vector<8x512xf32>
    %40 = tpu.matmul %38, %39, %cst_22 {dimension_numbers = #tpu.dot_dimension_numbers<[1], [0], [0], [1], [0, 0, 1, 1], [], []>} : vector<8x512xbf16>, vector<512x512xbf16>, vector<8x512xf32> -> vector<8x512xf32>
    %41 = vector.broadcast %3 : vector<1x512xf32> to vector<8x512xf32>
    %42 = arith.addf %40, %41 : vector<8x512xf32>
    %cst_23 = arith.constant dense<0.000000e+00> : vector<8xf32>
    %43 = vector.multi_reduction <add>, %42, %cst_23 [1] : vector<8x512xf32> to vector<8xf32>
    %44 = vector.shape_cast %43 : vector<8xf32> to vector<8x1xf32>
    %cst_24 = arith.constant 5.120000e+02 : f32
    %45 = vector.broadcast %cst_24 : f32 to vector<8x1xf32>
    %46 = arith.divf %44, %45 : vector<8x1xf32>
    %47 = vector.broadcast %46 : vector<8x1xf32> to vector<8x512xf32>
    %48 = arith.subf %42, %47 : vector<8x512xf32>
    %49 = arith.mulf %48, %48 : vector<8x512xf32>
    %cst_25 = arith.constant dense<0.000000e+00> : vector<8xf32>
    %50 = vector.multi_reduction <add>, %49, %cst_25 [1] : vector<8x512xf32> to vector<8xf32>
    %51 = vector.shape_cast %50 : vector<8xf32> to vector<8x1xf32>
    %cst_26 = arith.constant 5.120000e+02 : f32
    %52 = vector.broadcast %cst_26 : f32 to vector<8x1xf32>
    %53 = arith.divf %51, %52 : vector<8x1xf32>
    %cst_27 = arith.constant 9.99999974E-6 : f32
    %54 = vector.broadcast %cst_27 : f32 to vector<8x1xf32>
    %55 = arith.addf %53, %54 : vector<8x1xf32>
    %56 = math.rsqrt %55 : vector<8x1xf32>
    %57 = vector.broadcast %56 : vector<8x1xf32> to vector<8x512xf32>
    %58 = arith.mulf %48, %57 : vector<8x512xf32>
    %59 = vector.broadcast %4 : vector<1x512xf32> to vector<8x512xf32>
    %60 = arith.mulf %58, %59 : vector<8x512xf32>
    %61 = vector.broadcast %5 : vector<1x512xf32> to vector<8x512xf32>
    %62 = arith.addf %60, %61 : vector<8x512xf32>
    %cst_28 = arith.constant 0.000000e+00 : f32
    %63 = vector.broadcast %cst_28 : f32 to vector<8x512xf32>
    %64 = arith.maximumf %62, %63 : vector<8x512xf32>
    %65 = arith.truncf %64 : vector<8x512xf32> to vector<8x512xbf16>
    %c0_29 = arith.constant 0 : index
    %c0_30 = arith.constant 0 : index
    %66 = vector.load %arg4[%c0_29, %c0_30] : memref<512x256xbf16, #tpu.memory_space<vmem>>, vector<512x256xbf16>
    %cst_31 = arith.constant dense<0.000000e+00> : vector<8x256xf32>
    %67 = tpu.matmul %65, %66, %cst_31 {dimension_numbers = #tpu.dot_dimension_numbers<[1], [0], [0], [1], [0, 0, 1, 1], [], []>} : vector<8x512xbf16>, vector<512x256xbf16>, vector<8x256xf32> -> vector<8x256xf32>
    %68 = vector.broadcast %6 : vector<1x256xf32> to vector<8x256xf32>
    %69 = arith.addf %67, %68 : vector<8x256xf32>
    %cst_32 = arith.constant dense<0.000000e+00> : vector<8xf32>
    %70 = vector.multi_reduction <add>, %69, %cst_32 [1] : vector<8x256xf32> to vector<8xf32>
    %71 = vector.shape_cast %70 : vector<8xf32> to vector<8x1xf32>
    %cst_33 = arith.constant 2.560000e+02 : f32
    %72 = vector.broadcast %cst_33 : f32 to vector<8x1xf32>
    %73 = arith.divf %71, %72 : vector<8x1xf32>
    %74 = vector.broadcast %73 : vector<8x1xf32> to vector<8x256xf32>
    %75 = arith.subf %69, %74 : vector<8x256xf32>
    %76 = arith.mulf %75, %75 : vector<8x256xf32>
    %cst_34 = arith.constant dense<0.000000e+00> : vector<8xf32>
    %77 = vector.multi_reduction <add>, %76, %cst_34 [1] : vector<8x256xf32> to vector<8xf32>
    %78 = vector.shape_cast %77 : vector<8xf32> to vector<8x1xf32>
    %cst_35 = arith.constant 2.560000e+02 : f32
    %79 = vector.broadcast %cst_35 : f32 to vector<8x1xf32>
    %80 = arith.divf %78, %79 : vector<8x1xf32>
    %cst_36 = arith.constant 9.99999974E-6 : f32
    %81 = vector.broadcast %cst_36 : f32 to vector<8x1xf32>
    %82 = arith.addf %80, %81 : vector<8x1xf32>
    %83 = math.rsqrt %82 : vector<8x1xf32>
    %84 = vector.broadcast %83 : vector<8x1xf32> to vector<8x256xf32>
    %85 = arith.mulf %75, %84 : vector<8x256xf32>
    %86 = vector.broadcast %7 : vector<1x256xf32> to vector<8x256xf32>
    %87 = arith.mulf %85, %86 : vector<8x256xf32>
    %88 = vector.broadcast %8 : vector<1x256xf32> to vector<8x256xf32>
    %89 = arith.addf %87, %88 : vector<8x256xf32>
    %cst_37 = arith.constant 0.000000e+00 : f32
    %90 = vector.broadcast %cst_37 : f32 to vector<8x256xf32>
    %91 = arith.maximumf %89, %90 : vector<8x256xf32>
    %92 = arith.truncf %91 : vector<8x256xf32> to vector<8x256xbf16>
    %c0_38 = arith.constant 0 : index
    %c0_39 = arith.constant 0 : index
    %93 = vector.load %arg5[%c0_38, %c0_39] : memref<256x8xbf16, #tpu.memory_space<vmem>>, vector<256x8xbf16>
    %cst_40 = arith.constant dense<0.000000e+00> : vector<8x8xf32>
    %94 = tpu.matmul %92, %93, %cst_40 {dimension_numbers = #tpu.dot_dimension_numbers<[1], [0], [0], [1], [0, 0, 1, 1], [], []>} : vector<8x256xbf16>, vector<256x8xbf16>, vector<8x8xf32> -> vector<8x8xf32>
    %95 = vector.broadcast %9 : vector<1x8xf32> to vector<8x8xf32>
    %96 = arith.addf %94, %95 : vector<8x8xf32>
    %97 = math.tanh %96 : vector<8x8xf32>
    %c0_41 = arith.constant 0 : index
    %c0_42 = arith.constant 0 : index
    %98 = vector.load %arg7[%c0_41, %c0_42] : memref<8x8xf32, #tpu.memory_space<vmem>>, vector<8x8xf32>
    tpu.vector_store %arg7[%c0_41, %c0_42], %97 {strides = array<i32>} : memref<8x8xf32, #tpu.memory_space<vmem>>, vector<8x8xf32>,
    return
  }
  func.func @transform_0(%arg0: i32) -> (i32, i32) {
    %c0_i32 = arith.constant 0 : i32
    %c0_i32_0 = arith.constant 0 : i32
    return %arg0, %c0_i32 : i32, i32
  }
  func.func @transform_1(%arg0: i32) -> (i32, i32) {
    %c0_i32 = arith.constant 0 : i32
    %c0_i32_0 = arith.constant 0 : i32
    %c0_i32_1 = arith.constant 0 : i32
    return %c0_i32, %c0_i32_0 : i32, i32
  }
  func.func @transform_2(%arg0: i32) -> (i32, i32) {
    %c0_i32 = arith.constant 0 : i32
    %c0_i32_0 = arith.constant 0 : i32
    %c0_i32_1 = arith.constant 0 : i32
    return %c0_i32, %c0_i32_0 : i32, i32
  }
  func.func @transform_3(%arg0: i32) -> (i32, i32) {
    %c0_i32 = arith.constant 0 : i32
    %c0_i32_0 = arith.constant 0 : i32
    %c0_i32_1 = arith.constant 0 : i32
    return %c0_i32, %c0_i32_0 : i32, i32
  }
  func.func @transform_4(%arg0: i32) -> (i32, i32) {
    %c0_i32 = arith.constant 0 : i32
    %c0_i32_0 = arith.constant 0 : i32
    %c0_i32_1 = arith.constant 0 : i32
    return %c0_i32, %c0_i32_0 : i32, i32
  }
  func.func @transform_5(%arg0: i32) -> (i32, i32) {
    %c0_i32 = arith.constant 0 : i32
    %c0_i32_0 = arith.constant 0 : i32
    %c0_i32_1 = arith.constant 0 : i32
    return %c0_i32, %c0_i32_0 : i32, i32
  }
  func.func @transform_6(%arg0: i32) -> (i32, i32) {
    %c0_i32 = arith.constant 0 : i32
    %c0_i32_0 = arith.constant 0 : i32
    return %arg0, %c0_i32 : i32, i32
  }
}

</mosaic_0001>

<llo_original>
// kernel: actor_forward.1
$region0: #{actor_forward.1}
  #allocation0 [shape = 'u32[]', space=smem, size = 0x4, offset = 0x4, fixed_abs, tag = 'smem constant byte address 0x4 - core index']
  #allocation1 [shape = 'u32[72,128]{1,0:T(1,128)}', space=vmem, size = 0x9000, scoped, tag = 'internal scratch']
  %s0 = inlined_call_operand.vmem [shape: f32[8,32], index: 0, kind: input, shape index: {}]
  %s1 = inlined_call_operand.vmem [shape: bf16[32,512], index: 1, kind: input, shape index: {}]
  %s2 = inlined_call_operand.hbm [shape: bf16[512,512], index: 2, kind: input, shape index: {}]
  %s3 = inlined_call_operand.hbm [shape: bf16[512,256], index: 3, kind: input, shape index: {}]
  %s4 = inlined_call_operand.vmem [shape: bf16[256,8], index: 4, kind: input, shape index: {}]
  %s5 = inlined_call_operand.vmem [shape: f32[1,3968], index: 5, kind: input, shape index: {}]
  %s6 = inlined_call_operand.vmem [shape: f32[8,8], index: 6, kind: output, shape index: {}]
  %s7 = sld [smem:[#allocation0]]
  $region42: #{actor_forward.1} parent=0
    _
  %s9 = ssub.s32 1, %s7
  %s10 = scalar_select 0, %s9, %s7
  $region1: #{actor_forward.1} parent=0
    #allocation2 [shape = 'u8[524288]{0}', space=vmem, size = 0x80000, scoped, tag = 'input window, operand 2, single buffered']
    #allocation3 [shape = 's32[1]{0}', space=sflag, size = 0x4, scoped, tag = 'scoped memory for actor_forward.1']
    #allocation4 [shape = 'u8[262144]{0}', space=vmem, size = 0x40000, scoped, tag = 'input window, operand 3, single buffered']
    #allocation5 [shape = 's32[1]{0}', space=sflag, size = 0x4, scoped, tag = 'scoped memory for actor_forward.1']
    %11 = vsyncpa [#allocation3], 0
    %12 = vsyncpa [#allocation5], 0
    // Predicated region
    $region2: #{actor_forward.1} parent=1 // pred_check
      _
    $region3: #{actor_forward.1} parent=1 // pred_check_branch
      %14 = sbr.rel (0) target = $region5
    $region4: #{actor_forward.1} parent=1 // pred_region
      _
    $region5: #{actor_forward.1} parent=1 // pred_fallthru
      _
    // Predicated region
    $region6: #{actor_forward.1} parent=1 // pred_check
      _
    $region7: #{actor_forward.1} parent=1 // pred_check_branch
      %16 = sbr.rel (0) target = $region9
    $region8: #{actor_forward.1} parent=1 // pred_region
      _
    $region9: #{actor_forward.1} parent=1 // pred_fallthru
      _
    // Predicated region
    $region10: #{actor_forward.1} parent=1 // pred_check
      _
    $region11: #{actor_forward.1} parent=1 // pred_check_branch
      %18 = sbr.rel (0) target = $region13
    $region12: #{actor_forward.1} parent=1 // pred_region
      %20 = vsyncadd [#allocation3], 0
      %s21 = sshll.u32 %s2, 4
      %s22 = int_to_ptr.hbm [resolvable:$true] %s21
      %s23 = sshll.u32 [#allocation2], 4
      %s24 = int_to_ptr.vmem [resolvable:$true] %s23
      %29 = dma.hbm_to_vmem [thread:$0]  %s22, 16384, %s24, [#allocation3], 256, 256, 16
    $region13: #{actor_forward.1} parent=1 // pred_fallthru
      _
    // Predicated region
    $region14: #{actor_forward.1} parent=1 // pred_check
      _
    $region15: #{actor_forward.1} parent=1 // pred_check_branch
      %31 = sbr.rel (0) target = $region17
    $region16: #{actor_forward.1} parent=1 // pred_region
      %33 = vsyncadd [#allocation5], 0
      %s34 = sshll.u32 %s3, 4
      %s35 = int_to_ptr.hbm [resolvable:$true] %s34
      %s36 = sshll.u32 [#allocation4], 4
      %s37 = int_to_ptr.vmem [resolvable:$true] %s36
      %42 = dma.hbm_to_vmem [thread:$0]  %s35, 8192, %s37, [#allocation5], 128, 128, 8
    $region17: #{actor_forward.1} parent=1 // pred_fallthru
      _
    // Predicated region
    $region18: #{actor_forward.1} parent=1 // pred_check
      _
    $region19: #{actor_forward.1} parent=1 // pred_check_branch
      %44 = sbr.rel (0) target = $region21
    $region20: #{actor_forward.1} parent=1 // pred_region
      _
    $region21: #{actor_forward.1} parent=1 // pred_fallthru
      _
    // Predicated region
    $region22: #{actor_forward.1} parent=1 // pred_check
      _
    $region23: #{actor_forward.1} parent=1 // pred_check_branch
      %46 = sbr.rel (0) target = $region25
    $region24: #{actor_forward.1} parent=1 // pred_region
      _
    $region25: #{actor_forward.1} parent=1 // pred_fallthru
      _
    // Predicated region
    $region26: #{actor_forward.1} parent=1 // pred_check
      _
    $region27: #{actor_forward.1} parent=1 // pred_check_branch
      %48 = sbr.rel (0) target = $region29
    $region28: #{actor_forward.1} parent=1 // pred_region
      %50 = dma.done [#allocation3], 16384
    $region29: #{actor_forward.1} parent=1 // pred_fallthru
      _
    // Predicated region
    $region30: #{actor_forward.1} parent=1 // pred_check
      _
    $region31: #{actor_forward.1} parent=1 // pred_check_branch
      %52 = sbr.rel (0) target = $region33
    $region32: #{actor_forward.1} parent=1 // pred_region
      %54 = dma.done [#allocation5], 8192
    $region33: #{actor_forward.1} parent=1 // pred_fallthru
      _
    %v56 = vld [vmem:[%s5] sm:$0xf]
    %v57 = vld [vmem:[%s5 + $0x4] sm:$0xf]
    %v58 = vld [vmem:[%s5 + $0x8] sm:$0xf]
    %v59 = vld [vmem:[%s5 + $0xc] sm:$0xf]
    %v60 = vld [vmem:[%s5 + $0x10] sm:$0xf]
    %v61 = vld [vmem:[%s5 + $0x14] sm:$0xf]
    %v62 = vld [vmem:[%s5 + $0x18] sm:$0x3]
    %v63 = vld [vmem:[%s5 + $0x1a] sm:$0x3]
    %v64 = vld [vmem:[%s5 + $0x1c] sm:$0x3]
    %v65 = vld [vmem:[%s5 + $0x1e] sm:$0x1]
    %v66 = vld [vmem:[%s0] sm:$0xff]
    %v67 = vpack.c.bf16 %v66, %v66
    %v68 = vld [vmem:[%s1] sm:$0xff]
    %v69 = vld [vmem:[%s1 + $0x8] sm:$0xff]
    %v70 = vld [vmem:[%s1 + $0x10] sm:$0xff]
    %v71 = vld [vmem:[%s1 + $0x18] sm:$0xff]
    %v72 = vld [vmem:[%s1 + $0x20] sm:$0xff]
    %v73 = vld [vmem:[%s1 + $0x28] sm:$0xff]
    %v74 = vld [vmem:[%s1 + $0x30] sm:$0xff]
    %v75 = vld [vmem:[%s1 + $0x38] sm:$0xff]
    %v77 = vperm.slane %v56, 0
    %v78 = vperm.slane %v56, 1
    %v79 = vperm.slane %v56, 2
    %v80 = vperm.slane %v56, 3
    %v93 = vunpack.c.l.b16 %v68
    %v94 = vunpack.c.h.b16 %v68
    %v95 = vunpack.c.l.b16 %v69
    %v96 = vunpack.c.h.b16 %v69
    %v97 = vunpack.c.l.b16 %v70
    %v98 = vunpack.c.h.b16 %v70
    %v99 = vunpack.c.l.b16 %v71
    %v100 = vunpack.c.h.b16 %v71
    %v101 = vunpack.c.l.b16 %v72
    %v102 = vunpack.c.h.b16 %v72
    %v103 = vunpack.c.l.b16 %v73
    %v104 = vunpack.c.h.b16 %v73
    %v105 = vunpack.c.l.b16 %v74
    %v106 = vunpack.c.h.b16 %v74
    %v107 = vunpack.c.l.b16 %v75
    %v108 = vunpack.c.h.b16 %v75
    %v109 = vpack.c.b16 %v97, %v93
    %v110 = vpack.c.b16 %v98, %v94
    %v111 = vpack.c.b16 %v99, %v95
    %v112 = vpack.c.b16 %v100, %v96
    %v113 = vpack.c.b16 %v105, %v101
    %v114 = vpack.c.b16 %v106, %v102
    %v115 = vpack.c.b16 %v107, %v103
    %v116 = vpack.c.b16 %v108, %v104
    %vm125 = vcmask 261120
    %v127 = vsel %vm125, %v67, 0
    %129 = vmatpush.bf16.msra.mxu0 0
    %130 = vmatpush.bf16.msra.mxu0 0
    %131 = vmatpush.bf16.msra.mxu0 0
    %132 = vmatpush.bf16.msra.mxu0 0
    %133 = vmatpush.bf16.msra.mxu0 0
    %134 = vmatpush.bf16.msra.mxu0 0
    %135 = vmatpush.bf16.msra.mxu0 %v113
    %136 = vmatpush.bf16.msra.mxu0 %v109
    %137 = vmatmul.bf16.gmra.mxu0 %v127
    %v138 = vpop.f32.mrf.mxu0
    %v139 = vadd.f32 %v77, %v138
    %v140 = vpop.f32.mrf.mxu0
    %141 = vdwg.mxu0
    %142 = vmatpush.bf16.msra.mxu0 0
    %143 = vmatpush.bf16.msra.mxu0 0
    %144 = vmatpush.bf16.msra.mxu0 0
    %145 = vmatpush.bf16.msra.mxu0 0
    %146 = vmatpush.bf16.msra.mxu0 0
    %147 = vmatpush.bf16.msra.mxu0 0
    %148 = vmatpush.bf16.msra.mxu0 %v114
    %149 = vmatpush.bf16.msra.mxu0 %v110
    %150 = vmatmul.bf16.gmra.mxu0 %v127
    %v151 = vpop.f32.mrf.mxu0
    %v152 = vadd.f32 %v78, %v151
    %v153 = vpop.f32.mrf.mxu0
    %154 = vdwg.mxu0
    %155 = vmatpush.bf16.msra.mxu0 0
    %156 = vmatpush.bf16.msra.mxu0 0
    %157 = vmatpush.bf16.msra.mxu0 0
    %158 = vmatpush.bf16.msra.mxu0 0
    %159 = vmatpush.bf16.msra.mxu0 0
    %160 = vmatpush.bf16.msra.mxu0 0
    %161 = vmatpush.bf16.msra.mxu0 %v115
    %162 = vmatpush.bf16.msra.mxu0 %v111
    %163 = vmatmul.bf16.gmra.mxu0 %v127
    %v164 = vpop.f32.mrf.mxu0
    %v165 = vadd.f32 %v79, %v164
    %v166 = vpop.f32.mrf.mxu0
    %167 = vdwg.mxu0
    %168 = vmatpush.bf16.msra.mxu0 0
    %169 = vmatpush.bf16.msra.mxu0 0
    %170 = vmatpush.bf16.msra.mxu0 0
    %171 = vmatpush.bf16.msra.mxu0 0
    %172 = vmatpush.bf16.msra.mxu0 0
    %173 = vmatpush.bf16.msra.mxu0 0
    %174 = vmatpush.bf16.msra.mxu0 %v116
    %175 = vmatpush.bf16.msra.mxu0 %v112
    %176 = vmatmul.bf16.gmra.mxu0 %v127
    %v177 = vpop.f32.mrf.mxu0
    %v178 = vadd.f32 %v80, %v177
    %v179 = vpop.f32.mrf.mxu0
    %180 = vdwg.mxu0
    %v181 = vadd.f32 %v139, %v152
    %v182 = vadd.f32 %v181, %v165
    %v183 = vadd.f32 %v182, %v178
    %184 = vadd.xlane.f32.xlu0 %v183
    %v185 = vpop.xlane.xlu0 %184
    %v186 = vrcp.pop 512.0
    %v187 = vmul.f32 512.0, %v186
    %v188 = vsub.f32 1.0, %v187
    %v189 = vmul.f32 %v186, %v188
    %v190 = vadd.f32 %v186, %v189
    %vm191 = vweird.f32 %v186
    %v192 = vsel %vm191, %v186, %v190
    %v193 = vmul.f32 %v185, %v192
    %v194 = vsub.f32 %v139, %v193
    %v195 = vsub.f32 %v152, %v193
    %v196 = vsub.f32 %v165, %v193
    %v197 = vsub.f32 %v178, %v193
    %v198 = vmul.f32 %v194, %v194
    %v199 = vmul.f32 %v195, %v195
    %v200 = vmul.f32 %v196, %v196
    %v201 = vmul.f32 %v197, %v197
    %v202 = vadd.f32 %v198, %v199
    %v203 = vadd.f32 %v202, %v200
    %v204 = vadd.f32 %v203, %v201
    %205 = vadd.xlane.f32.xlu0 %v204
    %v206 = vpop.xlane.xlu0 %205
    %v207 = vmul.f32 %v206, %v192
    %v208 = vadd.f32 %v207, 1e-05
    %v209 = vrsqrt.pop %v208
    %v210 = vmul.f32 %v209, %v208
    %v211 = vmul.f32 %v210, %v209
    %v212 = vmul.f32 0.5, %v211
    %v213 = vsub.f32 1.5, %v212
    %v214 = vmul.f32 %v209, %v213
    %vm215 = vweird.f32 %v208
    %vm216 = vweird.f32 %v209
    %vm217 = vmor %vm215, %vm216
    %v218 = vsel %vm217, %v209, %v214
    %v219 = vmul.f32 %v194, %v218
    %v220 = vmul.f32 %v195, %v218
    %v221 = vmul.f32 %v196, %v218
    %v222 = vmul.f32 %v197, %v218
    %v224 = vperm.slane %v57, 0
    %v225 = vperm.slane %v57, 1
    %v226 = vperm.slane %v57, 2
    %v227 = vperm.slane %v57, 3
    %v232 = vmul.f32 %v219, %v224
    %v233 = vmul.f32 %v220, %v225
    %v234 = vmul.f32 %v221, %v226
    %v235 = vmul.f32 %v222, %v227
    %v237 = vperm.slane %v58, 0
    %v238 = vperm.slane %v58, 1
    %v239 = vperm.slane %v58, 2
    %v240 = vperm.slane %v58, 3
    %v245 = vadd.f32 %v232, %v237
    %v246 = vadd.f32 %v233, %v238
    %v247 = vadd.f32 %v234, %v239
    %v248 = vadd.f32 %v235, %v240
    %v249 = vmax.f32 %v245, 0.0
    %v250 = vmax.f32 %v246, 0.0
    %v251 = vmax.f32 %v247, 0.0
    %v252 = vmax.f32 %v248, 0.0
    %v253 = vpack.c.bf16 %v249, %v249
    %v254 = vpack.c.bf16 %v250, %v250
    %v255 = vpack.c.bf16 %v251, %v251
    %v256 = vpack.c.bf16 %v252, %v252
    %v257 = vld [vmem:[#allocation2] sm:$0xff]
    %v258 = vld [vmem:[#allocation2 + $0x8] sm:$0xff]
    %v259 = vld [vmem:[#allocation2 + $0x10] sm:$0xff]
    %v260 = vld [vmem:[#allocation2 + $0x18] sm:$0xff]
    %v261 = vld [vmem:[#allocation2 + $0x20] sm:$0xff]
    %v262 = vld [vmem:[#allocation2 + $0x28] sm:$0xff]
    %v263 = vld [vmem:[#allocation2 + $0x30] sm:$0xff]
    %v264 = vld [vmem:[#allocation2 + $0x38] sm:$0xff]
    %v265 = vld [vmem:[#allocation2 + $0x40] sm:$0xff]
    %v266 = vld [vmem:[#allocation2 + $0x48] sm:$0xff]
    %v267 = vld [vmem:[#allocation2 + $0x50] sm:$0xff]
    %v268 = vld [vmem:[#allocation2 + $0x58] sm:$0xff]
    %v269 = vld [vmem:[#allocation2 + $0x60] sm:$0xff]
    %v270 = vld [vmem:[#allocation2 + $0x68] sm:$0xff]
    %v271 = vld [vmem:[#allocation2 + $0x70] sm:$0xff]
    %v272 = vld [vmem:[#allocation2 + $0x78] sm:$0xff]
    %v273 = vld [vmem:[#allocation2 + $0x80] sm:$0xff]
    %v274 = vld [vmem:[#allocation2 + $0x88] sm:$0xff]
    %v275 = vld [vmem:[#allocation2 + $0x90] sm:$0xff]
    %v276 = vld [vmem:[#allocation2 + $0x98] sm:$0xff]
    %v277 = vld [vmem:[#allocation2 + $0xa0] sm:$0xff]
    %v278 = vld [vmem:[#allocation2 + $0xa8] sm:$0xff]
    %v279 = vld [vmem:[#allocation2 + $0xb0] sm:$0xff]
    %v280 = vld [vmem:[#allocation2 + $0xb8] sm:$0xff]
    %v281 = vld [vmem:[#allocation2 + $0xc0] sm:$0xff]
    %v282 = vld [vmem:[#allocation2 + $0xc8] sm:$0xff]
    %v283 = vld [vmem:[#allocation2 + $0xd0] sm:$0xff]
    %v284 = vld [vmem:[#allocation2 + $0xd8] sm:$0xff]
    %v285 = vld [vmem:[#allocation2 + $0xe0] sm:$0xff]
    %v286 = vld [vmem:[#allocation2 + $0xe8] sm:$0xff]
    %v287 = vld [vmem:[#allocation2 + $0xf0] sm:$0xff]
    %v288 = vld [vmem:[#allocation2 + $0xf8] sm:$0xff]
    %v289 = vld [vmem:[#allocation2 + $0x100] sm:$0xff]
    %v290 = vld [vmem:[#allocation2 + $0x108] sm:$0xff]
    %v291 = vld [vmem:[#allocation2 + $0x110] sm:$0xff]
    %v292 = vld [vmem:[#allocation2 + $0x118] sm:$0xff]
    %v293 = vld [vmem:[#allocation2 + $0x120] sm:$0xff]
    %v294 = vld [vmem:[#allocation2 + $0x128] sm:$0xff]
    %v295 = vld [vmem:[#allocation2 + $0x130] sm:$0xff]
    %v296 = vld [vmem:[#allocation2 + $0x138] sm:$0xff]
    %v297 = vld [vmem:[#allocation2 + $0x140] sm:$0xff]
    %v298 = vld [vmem:[#allocation2 + $0x148] sm:$0xff]
    %v299 = vld [vmem:[#allocation2 + $0x150] sm:$0xff]
    %v300 = vld [vmem:[#allocation2 + $0x158] sm:$0xff]
    %v301 = vld [vmem:[#allocation2 + $0x160] sm:$0xff]
    %v302 = vld [vmem:[#allocation2 + $0x168] sm:$0xff]
    %v303 = vld [vmem:[#allocation2 + $0x170] sm:$0xff]
    %v304 = vld [vmem:[#allocation2 + $0x178] sm:$0xff]
    %v305 = vld [vmem:[#allocation2 + $0x180] sm:$0xff]
    %v306 = vld [vmem:[#allocation2 + $0x188] sm:$0xff]
    %v307 = vld [vmem:[#allocation2 + $0x190] sm:$0xff]
    %v308 = vld [vmem:[#allocation2 + $0x198] sm:$0xff]
    %v309 = vld [vmem:[#allocation2 + $0x1a0] sm:$0xff]
    %v310 = vld [vmem:[#allocation2 + $0x1a8] sm:$0xff]
    %v311 = vld [vmem:[#allocation2 + $0x1b0] sm:$0xff]
    %v312 = vld [vmem:[#allocation2 + $0x1b8] sm:$0xff]
    %v313 = vld [vmem:[#allocation2 + $0x1c0] sm:$0xff]
    %v314 = vld [vmem:[#allocation2 + $0x1c8] sm:$0xff]
    %v315 = vld [vmem:[#allocation2 + $0x1d0] sm:$0xff]
    %v316 = vld [vmem:[#allocation2 + $0x1d8] sm:$0xff]
    %v317 = vld [vmem:[#allocation2 + $0x1e0] sm:$0xff]
    %v318 = vld [vmem:[#allocation2 + $0x1e8] sm:$0xff]
    %v319 = vld [vmem:[#allocation2 + $0x1f0] sm:$0xff]
    %v320 = vld [vmem:[#allocation2 + $0x1f8] sm:$0xff]
    %v321 = vld [vmem:[#allocation2 + $0x200] sm:$0xff]
    %v322 = vld [vmem:[#allocation2 + $0x208] sm:$0xff]
    %v323 = vld [vmem:[#allocation2 + $0x210] sm:$0xff]
    %v324 = vld [vmem:[#allocation2 + $0x218] sm:$0xff]
    %v325 = vld [vmem:[#allocation2 + $0x220] sm:$0xff]
    %v326 = vld [vmem:[#allocation2 + $0x228] sm:$0xff]
    %v327 = vld [vmem:[#allocation2 + $0x230] sm:$0xff]
    %v328 = vld [vmem:[#allocation2 + $0x238] sm:$0xff]
    %v329 = vld [vmem:[#allocation2 + $0x240] sm:$0xff]
    %v330 = vld [vmem:[#allocation2 + $0x248] sm:$0xff]
    %v331 = vld [vmem:[#allocation2 + $0x250] sm:$0xff]
    %v332 = vld [vmem:[#allocation2 + $0x258] sm:$0xff]
    %v333 = vld [vmem:[#allocation2 + $0x260] sm:$0xff]
    %v334 = vld [vmem:[#allocation2 + $0x268] sm:$0xff]
    %v335 = vld [vmem:[#allocation2 + $0x270] sm:$0xff]
    %v336 = vld [vmem:[#allocation2 + $0x278] sm:$0xff]
    %v337 = vld [vmem:[#allocation2 + $0x280] sm:$0xff]
    %v338 = vld [vmem:[#allocation2 + $0x288] sm:$0xff]
    %v339 = vld [vmem:[#allocation2 + $0x290] sm:$0xff]
    %v340 = vld [vmem:[#allocation2 + $0x298] sm:$0xff]
    %v341 = vld [vmem:[#allocation2 + $0x2a0] sm:$0xff]
    %v342 = vld [vmem:[#allocation2 + $0x2a8] sm:$0xff]
    %v343 = vld [vmem:[#allocation2 + $0x2b0] sm:$0xff]
    %v344 = vld [vmem:[#allocation2 + $0x2b8] sm:$0xff]
    %v345 = vld [vmem:[#allocation2 + $0x2c0] sm:$0xff]
    %v346 = vld [vmem:[#allocation2 + $0x2c8] sm:$0xff]
    %v347 = vld [vmem:[#allocation2 + $0x2d0] sm:$0xff]
    %v348 = vld [vmem:[#allocation2 + $0x2d8] sm:$0xff]
    %v349 = vld [vmem:[#allocation2 + $0x2e0] sm:$0xff]
    %v350 = vld [vmem:[#allocation2 + $0x2e8] sm:$0xff]
    %v351 = vld [vmem:[#allocation2 + $0x2f0] sm:$0xff]
    %v352 = vld [vmem:[#allocation2 + $0x2f8] sm:$0xff]
    %v353 = vld [vmem:[#allocation2 + $0x300] sm:$0xff]
    %v354 = vld [vmem:[#allocation2 + $0x308] sm:$0xff]
    %v355 = vld [vmem:[#allocation2 + $0x310] sm:$0xff]
    %v356 = vld [vmem:[#allocation2 + $0x318] sm:$0xff]
    %v357 = vld [vmem:[#allocation2 + $0x320] sm:$0xff]
    %v358 = vld [vmem:[#allocation2 + $0x328] sm:$0xff]
    %v359 = vld [vmem:[#allocation2 + $0x330] sm:$0xff]
    %v360 = vld [vmem:[#allocation2 + $0x338] sm:$0xff]
    %v361 = vld [vmem:[#allocation2 + $0x340] sm:$0xff]
    %v362 = vld [vmem:[#allocation2 + $0x348] sm:$0xff]
    %v363 = vld [vmem:[#allocation2 + $0x350] sm:$0xff]
    %v364 = vld [vmem:[#allocation2 + $0x358] sm:$0xff]
    %v365 = vld [vmem:[#allocation2 + $0x360] sm:$0xff]
    %v366 = vld [vmem:[#allocation2 + $0x368] sm:$0xff]
    %v367 = vld [vmem:[#allocation2 + $0x370] sm:$0xff]
    %v368 = vld [vmem:[#allocation2 + $0x378] sm:$0xff]
    %v369 = vld [vmem:[#allocation2 + $0x380] sm:$0xff]
    %v370 = vld [vmem:[#allocation2 + $0x388] sm:$0xff]
    %v371 = vld [vmem:[#allocation2 + $0x390] sm:$0xff]
    %v372 = vld [vmem:[#allocation2 + $0x398] sm:$0xff]
    %v373 = vld [vmem:[#allocation2 + $0x3a0] sm:$0xff]
    %v374 = vld [vmem:[#allocation2 + $0x3a8] sm:$0xff]
    %v375 = vld [vmem:[#allocation2 + $0x3b0] sm:$0xff]
    %v376 = vld [vmem:[#allocation2 + $0x3b8] sm:$0xff]
    %v377 = vld [vmem:[#allocation2 + $0x3c0] sm:$0xff]
    %v378 = vld [vmem:[#allocation2 + $0x3c8] sm:$0xff]
    %v379 = vld [vmem:[#allocation2 + $0x3d0] sm:$0xff]
    %v380 = vld [vmem:[#allocation2 + $0x3d8] sm:$0xff]
    %v381 = vld [vmem:[#allocation2 + $0x3e0] sm:$0xff]
    %v382 = vld [vmem:[#allocation2 + $0x3e8] sm:$0xff]
    %v383 = vld [vmem:[#allocation2 + $0x3f0] sm:$0xff]
    %v384 = vld [vmem:[#allocation2 + $0x3f8] sm:$0xff]
    %v386 = vperm.slane %v59, 0
    %v387 = vperm.slane %v59, 1
    %v388 = vperm.slane %v59, 2
    %v389 = vperm.slane %v59, 3
    %v522 = vunpack.c.l.b16 %v257
    %v523 = vunpack.c.h.b16 %v257
    %v524 = vunpack.c.l.b16 %v258
    %v525 = vunpack.c.h.b16 %v258
    %v526 = vunpack.c.l.b16 %v259
    %v527 = vunpack.c.h.b16 %v259
    %v528 = vunpack.c.l.b16 %v260
    %v529 = vunpack.c.h.b16 %v260
    %v530 = vunpack.c.l.b16 %v261
    %v531 = vunpack.c.h.b16 %v261
    %v532 = vunpack.c.l.b16 %v262
    %v533 = vunpack.c.h.b16 %v262
    %v534 = vunpack.c.l.b16 %v263
    %v535 = vunpack.c.h.b16 %v263
    %v536 = vunpack.c.l.b16 %v264
    %v537 = vunpack.c.h.b16 %v264
    %v538 = vunpack.c.l.b16 %v265
    %v539 = vunpack.c.h.b16 %v265
    %v540 = vunpack.c.l.b16 %v266
    %v541 = vunpack.c.h.b16 %v266
    %v542 = vunpack.c.l.b16 %v267
    %v543 = vunpack.c.h.b16 %v267
    %v544 = vunpack.c.l.b16 %v268
    %v545 = vunpack.c.h.b16 %v268
    %v546 = vunpack.c.l.b16 %v269
    %v547 = vunpack.c.h.b16 %v269
    %v548 = vunpack.c.l.b16 %v270
    %v549 = vunpack.c.h.b16 %v270
    %v550 = vunpack.c.l.b16 %v271
    %v551 = vunpack.c.h.b16 %v271
    %v552 = vunpack.c.l.b16 %v272
    %v553 = vunpack.c.h.b16 %v272
    %v554 = vunpack.c.l.b16 %v273
    %v555 = vunpack.c.h.b16 %v273
    %v556 = vunpack.c.l.b16 %v274
    %v557 = vunpack.c.h.b16 %v274
    %v558 = vunpack.c.l.b16 %v275
    %v559 = vunpack.c.h.b16 %v275
    %v560 = vunpack.c.l.b16 %v276
    %v561 = vunpack.c.h.b16 %v276
    %v562 = vunpack.c.l.b16 %v277
    %v563 = vunpack.c.h.b16 %v277
    %v564 = vunpack.c.l.b16 %v278
    %v565 = vunpack.c.h.b16 %v278
    %v566 = vunpack.c.l.b16 %v279
    %v567 = vunpack.c.h.b16 %v279
    %v568 = vunpack.c.l.b16 %v280
    %v569 = vunpack.c.h.b16 %v280
    %v570 = vunpack.c.l.b16 %v281
    %v571 = vunpack.c.h.b16 %v281
    %v572 = vunpack.c.l.b16 %v282
    %v573 = vunpack.c.h.b16 %v282
    %v574 = vunpack.c.l.b16 %v283
    %v575 = vunpack.c.h.b16 %v283
    %v576 = vunpack.c.l.b16 %v284
    %v577 = vunpack.c.h.b16 %v284
    %v578 = vunpack.c.l.b16 %v285
    %v579 = vunpack.c.h.b16 %v285
    %v580 = vunpack.c.l.b16 %v286
    %v581 = vunpack.c.h.b16 %v286
    %v582 = vunpack.c.l.b16 %v287
    %v583 = vunpack.c.h.b16 %v287
    %v584 = vunpack.c.l.b16 %v288
    %v585 = vunpack.c.h.b16 %v288
    %v586 = vunpack.c.l.b16 %v289
    %v587 = vunpack.c.h.b16 %v289
    %v588 = vunpack.c.l.b16 %v290
    %v589 = vunpack.c.h.b16 %v290
    %v590 = vunpack.c.l.b16 %v291
    %v591 = vunpack.c.h.b16 %v291
    %v592 = vunpack.c.l.b16 %v292
    %v593 = vunpack.c.h.b16 %v292
    %v594 = vunpack.c.l.b16 %v293
    %v595 = vunpack.c.h.b16 %v293
    %v596 = vunpack.c.l.b16 %v294
    %v597 = vunpack.c.h.b16 %v294
    %v598 = vunpack.c.l.b16 %v295
    %v599 = vunpack.c.h.b16 %v295
    %v600 = vunpack.c.l.b16 %v296
    %v601 = vunpack.c.h.b16 %v296
    %v602 = vunpack.c.l.b16 %v297
    %v603 = vunpack.c.h.b16 %v297
    %v604 = vunpack.c.l.b16 %v298
    %v605 = vunpack.c.h.b16 %v298
    %v606 = vunpack.c.l.b16 %v299
    %v607 = vunpack.c.h.b16 %v299
    %v608 = vunpack.c.l.b16 %v300
    %v609 = vunpack.c.h.b16 %v300
    %v610 = vunpack.c.l.b16 %v301
    %v611 = vunpack.c.h.b16 %v301
    %v612 = vunpack.c.l.b16 %v302
    %v613 = vunpack.c.h.b16 %v302
    %v614 = vunpack.c.l.b16 %v303
    %v615 = vunpack.c.h.b16 %v303
    %v616 = vunpack.c.l.b16 %v304
    %v617 = vunpack.c.h.b16 %v304
    %v618 = vunpack.c.l.b16 %v305
    %v619 = vunpack.c.h.b16 %v305
    %v620 = vunpack.c.l.b16 %v306
    %v621 = vunpack.c.h.b16 %v306
    %v622 = vunpack.c.l.b16 %v307
    %v623 = vunpack.c.h.b16 %v307
    %v624 = vunpack.c.l.b16 %v308
    %v625 = vunpack.c.h.b16 %v308
    %v626 = vunpack.c.l.b16 %v309
    %v627 = vunpack.c.h.b16 %v309
    %v628 = vunpack.c.l.b16 %v310
    %v629 = vunpack.c.h.b16 %v310
    %v630 = vunpack.c.l.b16 %v311
    %v631 = vunpack.c.h.b16 %v311
    %v632 = vunpack.c.l.b16 %v312
    %v633 = vunpack.c.h.b16 %v312
    %v634 = vunpack.c.l.b16 %v313
    %v635 = vunpack.c.h.b16 %v313
    %v636 = vunpack.c.l.b16 %v314
    %v637 = vunpack.c.h.b16 %v314
    %v638 = vunpack.c.l.b16 %v315
    %v639 = vunpack.c.h.b16 %v315
    %v640 = vunpack.c.l.b16 %v316
    %v641 = vunpack.c.h.b16 %v316
    %v642 = vunpack.c.l.b16 %v317
    %v643 = vunpack.c.h.b16 %v317
    %v644 = vunpack.c.l.b16 %v318
    %v645 = vunpack.c.h.b16 %v318
    %v646 = vunpack.c.l.b16 %v319
    %v647 = vunpack.c.h.b16 %v319
    %v648 = vunpack.c.l.b16 %v320
    %v649 = vunpack.c.h.b16 %v320
    %v650 = vunpack.c.l.b16 %v321
    %v651 = vunpack.c.h.b16 %v321
    %v652 = vunpack.c.l.b16 %v322
    %v653 = vunpack.c.h.b16 %v322
    %v654 = vunpack.c.l.b16 %v323
    %v655 = vunpack.c.h.b16 %v323
    %v656 = vunpack.c.l.b16 %v324
    %v657 = vunpack.c.h.b16 %v324
    %v658 = vunpack.c.l.b16 %v325
    %v659 = vunpack.c.h.b16 %v325
    %v660 = vunpack.c.l.b16 %v326
    %v661 = vunpack.c.h.b16 %v326
    %v662 = vunpack.c.l.b16 %v327
    %v663 = vunpack.c.h.b16 %v327
    %v664 = vunpack.c.l.b16 %v328
    %v665 = vunpack.c.h.b16 %v328
    %v666 = vunpack.c.l.b16 %v329
    %v667 = vunpack.c.h.b16 %v329
    %v668 = vunpack.c.l.b16 %v330
    %v669 = vunpack.c.h.b16 %v330
    %v670 = vunpack.c.l.b16 %v331
    %v671 = vunpack.c.h.b16 %v331
    %v672 = vunpack.c.l.b16 %v332
    %v673 = vunpack.c.h.b16 %v332
    %v674 = vunpack.c.l.b16 %v333
    %v675 = vunpack.c.h.b16 %v333
    %v676 = vunpack.c.l.b16 %v334
    %v677 = vunpack.c.h.b16 %v334
    %v678 = vunpack.c.l.b16 %v335
    %v679 = vunpack.c.h.b16 %v335
    %v680 = vunpack.c.l.b16 %v336
    %v681 = vunpack.c.h.b16 %v336
    %v682 = vunpack.c.l.b16 %v337
    %v683 = vunpack.c.h.b16 %v337
    %v684 = vunpack.c.l.b16 %v338
    %v685 = vunpack.c.h.b16 %v338
    %v686 = vunpack.c.l.b16 %v339
    %v687 = vunpack.c.h.b16 %v339
    %v688 = vunpack.c.l.b16 %v340
    %v689 = vunpack.c.h.b16 %v340
    %v690 = vunpack.c.l.b16 %v341
    %v691 = vunpack.c.h.b16 %v341
    %v692 = vunpack.c.l.b16 %v342
    %v693 = vunpack.c.h.b16 %v342
    %v694 = vunpack.c.l.b16 %v343
    %v695 = vunpack.c.h.b16 %v343
    %v696 = vunpack.c.l.b16 %v344
    %v697 = vunpack.c.h.b16 %v344
    %v698 = vunpack.c.l.b16 %v345
    %v699 = vunpack.c.h.b16 %v345
    %v700 = vunpack.c.l.b16 %v346
    %v701 = vunpack.c.h.b16 %v346
    %v702 = vunpack.c.l.b16 %v347
    %v703 = vunpack.c.h.b16 %v347
    %v704 = vunpack.c.l.b16 %v348
    %v705 = vunpack.c.h.b16 %v348
    %v706 = vunpack.c.l.b16 %v349
    %v707 = vunpack.c.h.b16 %v349
    %v708 = vunpack.c.l.b16 %v350
    %v709 = vunpack.c.h.b16 %v350
    %v710 = vunpack.c.l.b16 %v351
    %v711 = vunpack.c.h.b16 %v351
    %v712 = vunpack.c.l.b16 %v352
    %v713 = vunpack.c.h.b16 %v352
    %v714 = vunpack.c.l.b16 %v353
    %v715 = vunpack.c.h.b16 %v353
    %v716 = vunpack.c.l.b16 %v354
    %v717 = vunpack.c.h.b16 %v354
    %v718 = vunpack.c.l.b16 %v355
    %v719 = vunpack.c.h.b16 %v355
    %v720 = vunpack.c.l.b16 %v356
    %v721 = vunpack.c.h.b16 %v356
    %v722 = vunpack.c.l.b16 %v357
    %v723 = vunpack.c.h.b16 %v357
    %v724 = vunpack.c.l.b16 %v358
    %v725 = vunpack.c.h.b16 %v358
    %v726 = vunpack.c.l.b16 %v359
    %v727 = vunpack.c.h.b16 %v359
    %v728 = vunpack.c.l.b16 %v360
    %v729 = vunpack.c.h.b16 %v360
    %v730 = vunpack.c.l.b16 %v361
    %v731 = vunpack.c.h.b16 %v361
    %v732 = vunpack.c.l.b16 %v362
    %v733 = vunpack.c.h.b16 %v362
    %v734 = vunpack.c.l.b16 %v363
    %v735 = vunpack.c.h.b16 %v363
    %v736 = vunpack.c.l.b16 %v364
    %v737 = vunpack.c.h.b16 %v364
    %v738 = vunpack.c.l.b16 %v365
    %v739 = vunpack.c.h.b16 %v365
    %v740 = vunpack.c.l.b16 %v366
    %v741 = vunpack.c.h.b16 %v366
    %v742 = vunpack.c.l.b16 %v367
    %v743 = vunpack.c.h.b16 %v367
    %v744 = vunpack.c.l.b16 %v368
    %v745 = vunpack.c.h.b16 %v368
    %v746 = vunpack.c.l.b16 %v369
    %v747 = vunpack.c.h.b16 %v369
    %v748 = vunpack.c.l.b16 %v370
    %v749 = vunpack.c.h.b16 %v370
    %v750 = vunpack.c.l.b16 %v371
    %v751 = vunpack.c.h.b16 %v371
    %v752 = vunpack.c.l.b16 %v372
    %v753 = vunpack.c.h.b16 %v372
    %v754 = vunpack.c.l.b16 %v373
    %v755 = vunpack.c.h.b16 %v373
    %v756 = vunpack.c.l.b16 %v374
    %v757 = vunpack.c.h.b16 %v374
    %v758 = vunpack.c.l.b16 %v375
    %v759 = vunpack.c.h.b16 %v375
    %v760 = vunpack.c.l.b16 %v376
    %v761 = vunpack.c.h.b16 %v376
    %v762 = vunpack.c.l.b16 %v377
    %v763 = vunpack.c.h.b16 %v377
    %v764 = vunpack.c.l.b16 %v378
    %v765 = vunpack.c.h.b16 %v378
    %v766 = vunpack.c.l.b16 %v379
    %v767 = vunpack.c.h.b16 %v379
    %v768 = vunpack.c.l.b16 %v380
    %v769 = vunpack.c.h.b16 %v380
    %v770 = vunpack.c.l.b16 %v381
    %v771 = vunpack.c.h.b16 %v381
    %v772 = vunpack.c.l.b16 %v382
    %v773 = vunpack.c.h.b16 %v382
    %v774 = vunpack.c.l.b16 %v383
    %v775 = vunpack.c.h.b16 %v383
    %v776 = vunpack.c.l.b16 %v384
    %v777 = vunpack.c.h.b16 %v384
    %v778 = vpack.c.b16 %v526, %v522
    %v779 = vpack.c.b16 %v527, %v523
    %v780 = vpack.c.b16 %v528, %v524
    %v781 = vpack.c.b16 %v529, %v525
    %v782 = vpack.c.b16 %v534, %v530
    %v783 = vpack.c.b16 %v535, %v531
    %v784 = vpack.c.b16 %v536, %v532
    %v785 = vpack.c.b16 %v537, %v533
    %v786 = vpack.c.b16 %v542, %v538
    %v787 = vpack.c.b16 %v543, %v539
    %v788 = vpack.c.b16 %v544, %v540
    %v789 = vpack.c.b16 %v545, %v541
    %v790 = vpack.c.b16 %v550, %v546
    %v791 = vpack.c.b16 %v551, %v547
    %v792 = vpack.c.b16 %v552, %v548
    %v793 = vpack.c.b16 %v553, %v549
    %v794 = vpack.c.b16 %v558, %v554
    %v795 = vpack.c.b16 %v559, %v555
    %v796 = vpack.c.b16 %v560, %v556
    %v797 = vpack.c.b16 %v561, %v557
    %v798 = vpack.c.b16 %v566, %v562
    %v799 = vpack.c.b16 %v567, %v563
    %v800 = vpack.c.b16 %v568, %v564
    %v801 = vpack.c.b16 %v569, %v565
    %v802 = vpack.c.b16 %v574, %v570
    %v803 = vpack.c.b16 %v575, %v571
    %v804 = vpack.c.b16 %v576, %v572
    %v805 = vpack.c.b16 %v577, %v573
    %v806 = vpack.c.b16 %v582, %v578
    %v807 = vpack.c.b16 %v583, %v579
    %v808 = vpack.c.b16 %v584, %v580
    %v809 = vpack.c.b16 %v585, %v581
    %v810 = vpack.c.b16 %v590, %v586
    %v811 = vpack.c.b16 %v591, %v587
    %v812 = vpack.c.b16 %v592, %v588
    %v813 = vpack.c.b16 %v593, %v589
    %v814 = vpack.c.b16 %v598, %v594
    %v815 = vpack.c.b16 %v599, %v595
    %v816 = vpack.c.b16 %v600, %v596
    %v817 = vpack.c.b16 %v601, %v597
    %v818 = vpack.c.b16 %v606, %v602
    %v819 = vpack.c.b16 %v607, %v603
    %v820 = vpack.c.b16 %v608, %v604
    %v821 = vpack.c.b16 %v609, %v605
    %v822 = vpack.c.b16 %v614, %v610
    %v823 = vpack.c.b16 %v615, %v611
    %v824 = vpack.c.b16 %v616, %v612
    %v825 = vpack.c.b16 %v617, %v613
    %v826 = vpack.c.b16 %v622, %v618
    %v827 = vpack.c.b16 %v623, %v619
    %v828 = vpack.c.b16 %v624, %v620
    %v829 = vpack.c.b16 %v625, %v621
    %v830 = vpack.c.b16 %v630, %v626
    %v831 = vpack.c.b16 %v631, %v627
    %v832 = vpack.c.b16 %v632, %v628
    %v833 = vpack.c.b16 %v633, %v629
    %v834 = vpack.c.b16 %v638, %v634
    %v835 = vpack.c.b16 %v639, %v635
    %v836 = vpack.c.b16 %v640, %v636
    %v837 = vpack.c.b16 %v641, %v637
    %v838 = vpack.c.b16 %v646, %v642
    %v839 = vpack.c.b16 %v647, %v643
    %v840 = vpack.c.b16 %v648, %v644
    %v841 = vpack.c.b16 %v649, %v645
    %v842 = vpack.c.b16 %v654, %v650
    %v843 = vpack.c.b16 %v655, %v651
    %v844 = vpack.c.b16 %v656, %v652
    %v845 = vpack.c.b16 %v657, %v653
    %v846 = vpack.c.b16 %v662, %v658
    %v847 = vpack.c.b16 %v663, %v659
    %v848 = vpack.c.b16 %v664, %v660
    %v849 = vpack.c.b16 %v665, %v661
    %v850 = vpack.c.b16 %v670, %v666
    %v851 = vpack.c.b16 %v671, %v667
    %v852 = vpack.c.b16 %v672, %v668
    %v853 = vpack.c.b16 %v673, %v669
    %v854 = vpack.c.b16 %v678, %v674
    %v855 = vpack.c.b16 %v679, %v675
    %v856 = vpack.c.b16 %v680, %v676
    %v857 = vpack.c.b16 %v681, %v677
    %v858 = vpack.c.b16 %v686, %v682
    %v859 = vpack.c.b16 %v687, %v683
    %v860 = vpack.c.b16 %v688, %v684
    %v861 = vpack.c.b16 %v689, %v685
    %v862 = vpack.c.b16 %v694, %v690
    %v863 = vpack.c.b16 %v695, %v691
    %v864 = vpack.c.b16 %v696, %v692
    %v865 = vpack.c.b16 %v697, %v693
    %v866 = vpack.c.b16 %v702, %v698
    %v867 = vpack.c.b16 %v703, %v699
    %v868 = vpack.c.b16 %v704, %v700
    %v869 = vpack.c.b16 %v705, %v701
    %v870 = vpack.c.b16 %v710, %v706
    %v871 = vpack.c.b16 %v711, %v707
    %v872 = vpack.c.b16 %v712, %v708
    %v873 = vpack.c.b16 %v713, %v709
    %v874 = vpack.c.b16 %v718, %v714
    %v875 = vpack.c.b16 %v719, %v715
    %v876 = vpack.c.b16 %v720, %v716
    %v877 = vpack.c.b16 %v721, %v717
    %v878 = vpack.c.b16 %v726, %v722
    %v879 = vpack.c.b16 %v727, %v723
    %v880 = vpack.c.b16 %v728, %v724
    %v881 = vpack.c.b16 %v729, %v725
    %v882 = vpack.c.b16 %v734, %v730
    %v883 = vpack.c.b16 %v735, %v731
    %v884 = vpack.c.b16 %v736, %v732
    %v885 = vpack.c.b16 %v737, %v733
    %v886 = vpack.c.b16 %v742, %v738
    %v887 = vpack.c.b16 %v743, %v739
    %v888 = vpack.c.b16 %v744, %v740
    %v889 = vpack.c.b16 %v745, %v741
    %v890 = vpack.c.b16 %v750, %v746
    %v891 = vpack.c.b16 %v751, %v747
    %v892 = vpack.c.b16 %v752, %v748
    %v893 = vpack.c.b16 %v753, %v749
    %v894 = vpack.c.b16 %v758, %v754
    %v895 = vpack.c.b16 %v759, %v755
    %v896 = vpack.c.b16 %v760, %v756
    %v897 = vpack.c.b16 %v761, %v757
    %v898 = vpack.c.b16 %v766, %v762
    %v899 = vpack.c.b16 %v767, %v763
    %v900 = vpack.c.b16 %v768, %v764
    %v901 = vpack.c.b16 %v769, %v765
    %v902 = vpack.c.b16 %v774, %v770
    %v903 = vpack.c.b16 %v775, %v771
    %v904 = vpack.c.b16 %v776, %v772
    %v905 = vpack.c.b16 %v777, %v773
    %1034 = vmatpush.bf16.msra.mxu0 %v806
    %1035 = vmatpush.bf16.msra.mxu0 %v802
    %1036 = vmatpush.bf16.msra.mxu0 %v798
    %1037 = vmatpush.bf16.msra.mxu0 %v794
    %1038 = vmatpush.bf16.msra.mxu0 %v790
    %1039 = vmatpush.bf16.msra.mxu0 %v786
    %1040 = vmatpush.bf16.msra.mxu0 %v782
    %1041 = vmatpush.bf16.msra.mxu0 %v778
    %1042 = vmatmul.bf16.gmra.mxu0 %v253
    %v1043 = vpop.f32.mrf.mxu0
    %v1044 = vadd.f32 %v386, %v1043
    %v1045 = vpop.f32.mrf.mxu0
    %1046 = vdwg.mxu0
    %1047 = vmatpush.bf16.msra.mxu0 %v838
    %1048 = vmatpush.bf16.msra.mxu0 %v834
    %1049 = vmatpush.bf16.msra.mxu0 %v830
    %1050 = vmatpush.bf16.msra.mxu0 %v826
    %1051 = vmatpush.bf16.msra.mxu0 %v822
    %1052 = vmatpush.bf16.msra.mxu0 %v818
    %1053 = vmatpush.bf16.msra.mxu0 %v814
    %1054 = vmatpush.bf16.msra.mxu0 %v810
    %1055 = vmatmul.bf16.gmra.mxu0 %v254
    %v1056 = vpop.f32.mrf.mxu0
    %v1057 = vadd.f32 %v1044, %v1056
    %v1058 = vpop.f32.mrf.mxu0
    %1059 = vdwg.mxu0
    %1060 = vmatpush.bf16.msra.mxu0 %v870
    %1061 = vmatpush.bf16.msra.mxu0 %v866
    %1062 = vmatpush.bf16.msra.mxu0 %v862
    %1063 = vmatpush.bf16.msra.mxu0 %v858
    %1064 = vmatpush.bf16.msra.mxu0 %v854
    %1065 = vmatpush.bf16.msra.mxu0 %v850
    %1066 = vmatpush.bf16.msra.mxu0 %v846
    %1067 = vmatpush.bf16.msra.mxu0 %v842
    %1068 = vmatmul.bf16.gmra.mxu0 %v255
    %v1069 = vpop.f32.mrf.mxu0
    %v1070 = vadd.f32 %v1057, %v1069
    %v1071 = vpop.f32.mrf.mxu0
    %1072 = vdwg.mxu0
    %1073 = vmatpush.bf16.msra.mxu0 %v902
    %1074 = vmatpush.bf16.msra.mxu0 %v898
    %1075 = vmatpush.bf16.msra.mxu0 %v894
    %1076 = vmatpush.bf16.msra.mxu0 %v890
    %1077 = vmatpush.bf16.msra.mxu0 %v886
    %1078 = vmatpush.bf16.msra.mxu0 %v882
    %1079 = vmatpush.bf16.msra.mxu0 %v878
    %1080 = vmatpush.bf16.msra.mxu0 %v874
    %1081 = vmatmul.bf16.gmra.mxu0 %v256
    %v1082 = vpop.f32.mrf.mxu0
    %v1083 = vadd.f32 %v1070, %v1082
    %v1084 = vpop.f32.mrf.mxu0
    %1085 = vdwg.mxu0
    %1086 = vmatpush.bf16.msra.mxu0 %v807
    %1087 = vmatpush.bf16.msra.mxu0 %v803
    %1088 = vmatpush.bf16.msra.mxu0 %v799
    %1089 = vmatpush.bf16.msra.mxu0 %v795
    %1090 = vmatpush.bf16.msra.mxu0 %v791
    %1091 = vmatpush.bf16.msra.mxu0 %v787
    %1092 = vmatpush.bf16.msra.mxu0 %v783
    %1093 = vmatpush.bf16.msra.mxu0 %v779
    %1094 = vmatmul.bf16.gmra.mxu0 %v253
    %v1095 = vpop.f32.mrf.mxu0
    %v1096 = vadd.f32 %v387, %v1095
    %v1097 = vpop.f32.mrf.mxu0
    %1098 = vdwg.mxu0
    %1099 = vmatpush.bf16.msra.mxu0 %v839
    %1100 = vmatpush.bf16.msra.mxu0 %v835
    %1101 = vmatpush.bf16.msra.mxu0 %v831
    %1102 = vmatpush.bf16.msra.mxu0 %v827
    %1103 = vmatpush.bf16.msra.mxu0 %v823
    %1104 = vmatpush.bf16.msra.mxu0 %v819
    %1105 = vmatpush.bf16.msra.mxu0 %v815
    %1106 = vmatpush.bf16.msra.mxu0 %v811
    %1107 = vmatmul.bf16.gmra.mxu0 %v254
    %v1108 = vpop.f32.mrf.mxu0
    %v1109 = vadd.f32 %v1096, %v1108
    %v1110 = vpop.f32.mrf.mxu0
    %1111 = vdwg.mxu0
    %1112 = vmatpush.bf16.msra.mxu0 %v871
    %1113 = vmatpush.bf16.msra.mxu0 %v867
    %1114 = vmatpush.bf16.msra.mxu0 %v863
    %1115 = vmatpush.bf16.msra.mxu0 %v859
    %1116 = vmatpush.bf16.msra.mxu0 %v855
    %1117 = vmatpush.bf16.msra.mxu0 %v851
    %1118 = vmatpush.bf16.msra.mxu0 %v847
    %1119 = vmatpush.bf16.msra.mxu0 %v843
    %1120 = vmatmul.bf16.gmra.mxu0 %v255
    %v1121 = vpop.f32.mrf.mxu0
    %v1122 = vadd.f32 %v1109, %v1121
    %v1123 = vpop.f32.mrf.mxu0
    %1124 = vdwg.mxu0
    %1125 = vmatpush.bf16.msra.mxu0 %v903
    %1126 = vmatpush.bf16.msra.mxu0 %v899
    %1127 = vmatpush.bf16.msra.mxu0 %v895
    %1128 = vmatpush.bf16.msra.mxu0 %v891
    %1129 = vmatpush.bf16.msra.mxu0 %v887
    %1130 = vmatpush.bf16.msra.mxu0 %v883
    %1131 = vmatpush.bf16.msra.mxu0 %v879
    %1132 = vmatpush.bf16.msra.mxu0 %v875
    %1133 = vmatmul.bf16.gmra.mxu0 %v256
    %v1134 = vpop.f32.mrf.mxu0
    %v1135 = vadd.f32 %v1122, %v1134
    %v1136 = vpop.f32.mrf.mxu0
    %1137 = vdwg.mxu0
    %1138 = vmatpush.bf16.msra.mxu0 %v808
    %1139 = vmatpush.bf16.msra.mxu0 %v804
    %1140 = vmatpush.bf16.msra.mxu0 %v800
    %1141 = vmatpush.bf16.msra.mxu0 %v796
    %1142 = vmatpush.bf16.msra.mxu0 %v792
    %1143 = vmatpush.bf16.msra.mxu0 %v788
    %1144 = vmatpush.bf16.msra.mxu0 %v784
    %1145 = vmatpush.bf16.msra.mxu0 %v780
    %1146 = vmatmul.bf16.gmra.mxu0 %v253
    %v1147 = vpop.f32.mrf.mxu0
    %v1148 = vadd.f32 %v388, %v1147
    %v1149 = vpop.f32.mrf.mxu0
    %1150 = vdwg.mxu0
    %1151 = vmatpush.bf16.msra.mxu0 %v840
    %1152 = vmatpush.bf16.msra.mxu0 %v836
    %1153 = vmatpush.bf16.msra.mxu0 %v832
    %1154 = vmatpush.bf16.msra.mxu0 %v828
    %1155 = vmatpush.bf16.msra.mxu0 %v824
    %1156 = vmatpush.bf16.msra.mxu0 %v820
    %1157 = vmatpush.bf16.msra.mxu0 %v816
    %1158 = vmatpush.bf16.msra.mxu0 %v812
    %1159 = vmatmul.bf16.gmra.mxu0 %v254
    %v1160 = vpop.f32.mrf.mxu0
    %v1161 = vadd.f32 %v1148, %v1160
    %v1162 = vpop.f32.mrf.mxu0
    %1163 = vdwg.mxu0
    %1164 = vmatpush.bf16.msra.mxu0 %v872
    %1165 = vmatpush.bf16.msra.mxu0 %v868
    %1166 = vmatpush.bf16.msra.mxu0 %v864
    %1167 = vmatpush.bf16.msra.mxu0 %v860
    %1168 = vmatpush.bf16.msra.mxu0 %v856
    %1169 = vmatpush.bf16.msra.mxu0 %v852
    %1170 = vmatpush.bf16.msra.mxu0 %v848
    %1171 = vmatpush.bf16.msra.mxu0 %v844
    %1172 = vmatmul.bf16.gmra.mxu0 %v255
    %v1173 = vpop.f32.mrf.mxu0
    %v1174 = vadd.f32 %v1161, %v1173
    %v1175 = vpop.f32.mrf.mxu0
    %1176 = vdwg.mxu0
    %1177 = vmatpush.bf16.msra.mxu0 %v904
    %1178 = vmatpush.bf16.msra.mxu0 %v900
    %1179 = vmatpush.bf16.msra.mxu0 %v896
    %1180 = vmatpush.bf16.msra.mxu0 %v892
    %1181 = vmatpush.bf16.msra.mxu0 %v888
    %1182 = vmatpush.bf16.msra.mxu0 %v884
    %1183 = vmatpush.bf16.msra.mxu0 %v880
    %1184 = vmatpush.bf16.msra.mxu0 %v876
    %1185 = vmatmul.bf16.gmra.mxu0 %v256
    %v1186 = vpop.f32.mrf.mxu0
    %v1187 = vadd.f32 %v1174, %v1186
    %v1188 = vpop.f32.mrf.mxu0
    %1189 = vdwg.mxu0
    %1190 = vmatpush.bf16.msra.mxu0 %v809
    %1191 = vmatpush.bf16.msra.mxu0 %v805
    %1192 = vmatpush.bf16.msra.mxu0 %v801
    %1193 = vmatpush.bf16.msra.mxu0 %v797
    %1194 = vmatpush.bf16.msra.mxu0 %v793
    %1195 = vmatpush.bf16.msra.mxu0 %v789
    %1196 = vmatpush.bf16.msra.mxu0 %v785
    %1197 = vmatpush.bf16.msra.mxu0 %v781
    %1198 = vmatmul.bf16.gmra.mxu0 %v253
    %v1199 = vpop.f32.mrf.mxu0
    %v1200 = vadd.f32 %v389, %v1199
    %v1201 = vpop.f32.mrf.mxu0
    %1202 = vdwg.mxu0
    %1203 = vmatpush.bf16.msra.mxu0 %v841
    %1204 = vmatpush.bf16.msra.mxu0 %v837
    %1205 = vmatpush.bf16.msra.mxu0 %v833
    %1206 = vmatpush.bf16.msra.mxu0 %v829
    %1207 = vmatpush.bf16.msra.mxu0 %v825
    %1208 = vmatpush.bf16.msra.mxu0 %v821
    %1209 = vmatpush.bf16.msra.mxu0 %v817
    %1210 = vmatpush.bf16.msra.mxu0 %v813
    %1211 = vmatmul.bf16.gmra.mxu0 %v254
    %v1212 = vpop.f32.mrf.mxu0
    %v1213 = vadd.f32 %v1200, %v1212
    %v1214 = vpop.f32.mrf.mxu0
    %1215 = vdwg.mxu0
    %1216 = vmatpush.bf16.msra.mxu0 %v873
    %1217 = vmatpush.bf16.msra.mxu0 %v869
    %1218 = vmatpush.bf16.msra.mxu0 %v865
    %1219 = vmatpush.bf16.msra.mxu0 %v861
    %1220 = vmatpush.bf16.msra.mxu0 %v857
    %1221 = vmatpush.bf16.msra.mxu0 %v853
    %1222 = vmatpush.bf16.msra.mxu0 %v849
    %1223 = vmatpush.bf16.msra.mxu0 %v845
    %1224 = vmatmul.bf16.gmra.mxu0 %v255
    %v1225 = vpop.f32.mrf.mxu0
    %v1226 = vadd.f32 %v1213, %v1225
    %v1227 = vpop.f32.mrf.mxu0
    %1228 = vdwg.mxu0
    %1229 = vmatpush.bf16.msra.mxu0 %v905
    %1230 = vmatpush.bf16.msra.mxu0 %v901
    %1231 = vmatpush.bf16.msra.mxu0 %v897
    %1232 = vmatpush.bf16.msra.mxu0 %v893
    %1233 = vmatpush.bf16.msra.mxu0 %v889
    %1234 = vmatpush.bf16.msra.mxu0 %v885
    %1235 = vmatpush.bf16.msra.mxu0 %v881
    %1236 = vmatpush.bf16.msra.mxu0 %v877
    %1237 = vmatmul.bf16.gmra.mxu0 %v256
    %v1238 = vpop.f32.mrf.mxu0
    %v1239 = vadd.f32 %v1226, %v1238
    %v1240 = vpop.f32.mrf.mxu0
    %1241 = vdwg.mxu0
    %v1242 = vadd.f32 %v1083, %v1135
    %v1243 = vadd.f32 %v1242, %v1187
    %v1244 = vadd.f32 %v1243, %v1239
    %1245 = vadd.xlane.f32.xlu0 %v1244
    %v1246 = vpop.xlane.xlu0 %1245
    %v1247 = vmul.f32 %v1246, %v192
    %v1248 = vsub.f32 %v1083, %v1247
    %v1249 = vsub.f32 %v1135, %v1247
    %v1250 = vsub.f32 %v1187, %v1247
    %v1251 = vsub.f32 %v1239, %v1247
    %v1252 = vmul.f32 %v1248, %v1248
    %v1253 = vmul.f32 %v1249, %v1249
    %v1254 = vmul.f32 %v1250, %v1250
    %v1255 = vmul.f32 %v1251, %v1251
    %v1256 = vadd.f32 %v1252, %v1253
    %v1257 = vadd.f32 %v1256, %v1254
    %v1258 = vadd.f32 %v1257, %v1255
    %1259 = vadd.xlane.f32.xlu0 %v1258
    %v1260 = vpop.xlane.xlu0 %1259
    %v1261 = vmul.f32 %v1260, %v192
    %v1262 = vadd.f32 %v1261, 1e-05
    %v1263 = vrsqrt.pop %v1262
    %v1264 = vmul.f32 %v1263, %v1262
    %v1265 = vmul.f32 %v1264, %v1263
    %v1266 = vmul.f32 0.5, %v1265
    %v1267 = vsub.f32 1.5, %v1266
    %v1268 = vmul.f32 %v1263, %v1267
    %vm1269 = vweird.f32 %v1262
    %vm1270 = vweird.f32 %v1263
    %vm1271 = vmor %vm1269, %vm1270
    %v1272 = vsel %vm1271, %v1263, %v1268
    %v1273 = vmul.f32 %v1248, %v1272
    %v1274 = vmul.f32 %v1249, %v1272
    %v1275 = vmul.f32 %v1250, %v1272
    %v1276 = vmul.f32 %v1251, %v1272
    %v1278 = vperm.slane %v60, 0
    %v1279 = vperm.slane %v60, 1
    %v1280 = vperm.slane %v60, 2
    %v1281 = vperm.slane %v60, 3
    %v1286 = vmul.f32 %v1273, %v1278
    %v1287 = vmul.f32 %v1274, %v1279
    %v1288 = vmul.f32 %v1275, %v1280
    %v1289 = vmul.f32 %v1276, %v1281
    %v1291 = vperm.slane %v61, 0
    %v1292 = vperm.slane %v61, 1
    %v1293 = vperm.slane %v61, 2
    %v1294 = vperm.slane %v61, 3
    %v1299 = vadd.f32 %v1286, %v1291
    %v1300 = vadd.f32 %v1287, %v1292
    %v1301 = vadd.f32 %v1288, %v1293
    %v1302 = vadd.f32 %v1289, %v1294
    %v1303 = vmax.f32 %v1299, 0.0
    %v1304 = vmax.f32 %v1300, 0.0
    %v1305 = vmax.f32 %v1301, 0.0
    %v1306 = vmax.f32 %v1302, 0.0
    %v1307 = vpack.c.bf16 %v1303, %v1303
    %v1308 = vpack.c.bf16 %v1304, %v1304
    %v1309 = vpack.c.bf16 %v1305, %v1305
    %v1310 = vpack.c.bf16 %v1306, %v1306
    %v1311 = vld [vmem:[#allocation4] sm:$0xff]
    %v1312 = vld [vmem:[#allocation4 + $0x8] sm:$0xff]
    %v1313 = vld [vmem:[#allocation4 + $0x10] sm:$0xff]
    %v1314 = vld [vmem:[#allocation4 + $0x18] sm:$0xff]
    %v1315 = vld [vmem:[#allocation4 + $0x20] sm:$0xff]
    %v1316 = vld [vmem:[#allocation4 + $0x28] sm:$0xff]
    %v1317 = vld [vmem:[#allocation4 + $0x30] sm:$0xff]
    %v1318 = vld [vmem:[#allocation4 + $0x38] sm:$0xff]
    %v1319 = vld [vmem:[#allocation4 + $0x40] sm:$0xff]
    %v1320 = vld [vmem:[#allocation4 + $0x48] sm:$0xff]
    %v1321 = vld [vmem:[#allocation4 + $0x50] sm:$0xff]
    %v1322 = vld [vmem:[#allocation4 + $0x58] sm:$0xff]
    %v1323 = vld [vmem:[#allocation4 + $0x60] sm:$0xff]
    %v1324 = vld [vmem:[#allocation4 + $0x68] sm:$0xff]
    %v1325 = vld [vmem:[#allocation4 + $0x70] sm:$0xff]
    %v1326 = vld [vmem:[#allocation4 + $0x78] sm:$0xff]
    %v1327 = vld [vmem:[#allocation4 + $0x80] sm:$0xff]
    %v1328 = vld [vmem:[#allocation4 + $0x88] sm:$0xff]
    %v1329 = vld [vmem:[#allocation4 + $0x90] sm:$0xff]
    %v1330 = vld [vmem:[#allocation4 + $0x98] sm:$0xff]
    %v1331 = vld [vmem:[#allocation4 + $0xa0] sm:$0xff]
    %v1332 = vld [vmem:[#allocation4 + $0xa8] sm:$0xff]
    %v1333 = vld [vmem:[#allocation4 + $0xb0] sm:$0xff]
    %v1334 = vld [vmem:[#allocation4 + $0xb8] sm:$0xff]
    %v1335 = vld [vmem:[#allocation4 + $0xc0] sm:$0xff]
    %v1336 = vld [vmem:[#allocation4 + $0xc8] sm:$0xff]
    %v1337 = vld [vmem:[#allocation4 + $0xd0] sm:$0xff]
    %v1338 = vld [vmem:[#allocation4 + $0xd8] sm:$0xff]
    %v1339 = vld [vmem:[#allocation4 + $0xe0] sm:$0xff]
    %v1340 = vld [vmem:[#allocation4 + $0xe8] sm:$0xff]
    %v1341 = vld [vmem:[#allocation4 + $0xf0] sm:$0xff]
    %v1342 = vld [vmem:[#allocation4 + $0xf8] sm:$0xff]
    %v1343 = vld [vmem:[#allocation4 + $0x100] sm:$0xff]
    %v1344 = vld [vmem:[#allocation4 + $0x108] sm:$0xff]
    %v1345 = vld [vmem:[#allocation4 + $0x110] sm:$0xff]
    %v1346 = vld [vmem:[#allocation4 + $0x118] sm:$0xff]
    %v1347 = vld [vmem:[#allocation4 + $0x120] sm:$0xff]
    %v1348 = vld [vmem:[#allocation4 + $0x128] sm:$0xff]
    %v1349 = vld [vmem:[#allocation4 + $0x130] sm:$0xff]
    %v1350 = vld [vmem:[#allocation4 + $0x138] sm:$0xff]
    %v1351 = vld [vmem:[#allocation4 + $0x140] sm:$0xff]
    %v1352 = vld [vmem:[#allocation4 + $0x148] sm:$0xff]
    %v1353 = vld [vmem:[#allocation4 + $0x150] sm:$0xff]
    %v1354 = vld [vmem:[#allocation4 + $0x158] sm:$0xff]
    %v1355 = vld [vmem:[#allocation4 + $0x160] sm:$0xff]
    %v1356 = vld [vmem:[#allocation4 + $0x168] sm:$0xff]
    %v1357 = vld [vmem:[#allocation4 + $0x170] sm:$0xff]
    %v1358 = vld [vmem:[#allocation4 + $0x178] sm:$0xff]
    %v1359 = vld [vmem:[#allocation4 + $0x180] sm:$0xff]
    %v1360 = vld [vmem:[#allocation4 + $0x188] sm:$0xff]
    %v1361 = vld [vmem:[#allocation4 + $0x190] sm:$0xff]
    %v1362 = vld [vmem:[#allocation4 + $0x198] sm:$0xff]
    %v1363 = vld [vmem:[#allocation4 + $0x1a0] sm:$0xff]
    %v1364 = vld [vmem:[#allocation4 + $0x1a8] sm:$0xff]
    %v1365 = vld [vmem:[#allocation4 + $0x1b0] sm:$0xff]
    %v1366 = vld [vmem:[#allocation4 + $0x1b8] sm:$0xff]
    %v1367 = vld [vmem:[#allocation4 + $0x1c0] sm:$0xff]
    %v1368 = vld [vmem:[#allocation4 + $0x1c8] sm:$0xff]
    %v1369 = vld [vmem:[#allocation4 + $0x1d0] sm:$0xff]
    %v1370 = vld [vmem:[#allocation4 + $0x1d8] sm:$0xff]
    %v1371 = vld [vmem:[#allocation4 + $0x1e0] sm:$0xff]
    %v1372 = vld [vmem:[#allocation4 + $0x1e8] sm:$0xff]
    %v1373 = vld [vmem:[#allocation4 + $0x1f0] sm:$0xff]
    %v1374 = vld [vmem:[#allocation4 + $0x1f8] sm:$0xff]
    %v1376 = vperm.slane %v62, 0
    %v1377 = vperm.slane %v62, 1
    %v1444 = vunpack.c.l.b16 %v1311
    %v1445 = vunpack.c.h.b16 %v1311
    %v1446 = vunpack.c.l.b16 %v1312
    %v1447 = vunpack.c.h.b16 %v1312
    %v1448 = vunpack.c.l.b16 %v1313
    %v1449 = vunpack.c.h.b16 %v1313
    %v1450 = vunpack.c.l.b16 %v1314
    %v1451 = vunpack.c.h.b16 %v1314
    %v1452 = vunpack.c.l.b16 %v1315
    %v1453 = vunpack.c.h.b16 %v1315
    %v1454 = vunpack.c.l.b16 %v1316
    %v1455 = vunpack.c.h.b16 %v1316
    %v1456 = vunpack.c.l.b16 %v1317
    %v1457 = vunpack.c.h.b16 %v1317
    %v1458 = vunpack.c.l.b16 %v1318
    %v1459 = vunpack.c.h.b16 %v1318
    %v1460 = vunpack.c.l.b16 %v1319
    %v1461 = vunpack.c.h.b16 %v1319
    %v1462 = vunpack.c.l.b16 %v1320
    %v1463 = vunpack.c.h.b16 %v1320
    %v1464 = vunpack.c.l.b16 %v1321
    %v1465 = vunpack.c.h.b16 %v1321
    %v1466 = vunpack.c.l.b16 %v1322
    %v1467 = vunpack.c.h.b16 %v1322
    %v1468 = vunpack.c.l.b16 %v1323
    %v1469 = vunpack.c.h.b16 %v1323
    %v1470 = vunpack.c.l.b16 %v1324
    %v1471 = vunpack.c.h.b16 %v1324
    %v1472 = vunpack.c.l.b16 %v1325
    %v1473 = vunpack.c.h.b16 %v1325
    %v1474 = vunpack.c.l.b16 %v1326
    %v1475 = vunpack.c.h.b16 %v1326
    %v1476 = vunpack.c.l.b16 %v1327
    %v1477 = vunpack.c.h.b16 %v1327
    %v1478 = vunpack.c.l.b16 %v1328
    %v1479 = vunpack.c.h.b16 %v1328
    %v1480 = vunpack.c.l.b16 %v1329
    %v1481 = vunpack.c.h.b16 %v1329
    %v1482 = vunpack.c.l.b16 %v1330
    %v1483 = vunpack.c.h.b16 %v1330
    %v1484 = vunpack.c.l.b16 %v1331
    %v1485 = vunpack.c.h.b16 %v1331
    %v1486 = vunpack.c.l.b16 %v1332
    %v1487 = vunpack.c.h.b16 %v1332
    %v1488 = vunpack.c.l.b16 %v1333
    %v1489 = vunpack.c.h.b16 %v1333
    %v1490 = vunpack.c.l.b16 %v1334
    %v1491 = vunpack.c.h.b16 %v1334
    %v1492 = vunpack.c.l.b16 %v1335
    %v1493 = vunpack.c.h.b16 %v1335
    %v1494 = vunpack.c.l.b16 %v1336
    %v1495 = vunpack.c.h.b16 %v1336
    %v1496 = vunpack.c.l.b16 %v1337
    %v1497 = vunpack.c.h.b16 %v1337
    %v1498 = vunpack.c.l.b16 %v1338
    %v1499 = vunpack.c.h.b16 %v1338
    %v1500 = vunpack.c.l.b16 %v1339
    %v1501 = vunpack.c.h.b16 %v1339
    %v1502 = vunpack.c.l.b16 %v1340
    %v1503 = vunpack.c.h.b16 %v1340
    %v1504 = vunpack.c.l.b16 %v1341
    %v1505 = vunpack.c.h.b16 %v1341
    %v1506 = vunpack.c.l.b16 %v1342
    %v1507 = vunpack.c.h.b16 %v1342
    %v1508 = vunpack.c.l.b16 %v1343
    %v1509 = vunpack.c.h.b16 %v1343
    %v1510 = vunpack.c.l.b16 %v1344
    %v1511 = vunpack.c.h.b16 %v1344
    %v1512 = vunpack.c.l.b16 %v1345
    %v1513 = vunpack.c.h.b16 %v1345
    %v1514 = vunpack.c.l.b16 %v1346
    %v1515 = vunpack.c.h.b16 %v1346
    %v1516 = vunpack.c.l.b16 %v1347
    %v1517 = vunpack.c.h.b16 %v1347
    %v1518 = vunpack.c.l.b16 %v1348
    %v1519 = vunpack.c.h.b16 %v1348
    %v1520 = vunpack.c.l.b16 %v1349
    %v1521 = vunpack.c.h.b16 %v1349
    %v1522 = vunpack.c.l.b16 %v1350
    %v1523 = vunpack.c.h.b16 %v1350
    %v1524 = vunpack.c.l.b16 %v1351
    %v1525 = vunpack.c.h.b16 %v1351
    %v1526 = vunpack.c.l.b16 %v1352
    %v1527 = vunpack.c.h.b16 %v1352
    %v1528 = vunpack.c.l.b16 %v1353
    %v1529 = vunpack.c.h.b16 %v1353
    %v1530 = vunpack.c.l.b16 %v1354
    %v1531 = vunpack.c.h.b16 %v1354
    %v1532 = vunpack.c.l.b16 %v1355
    %v1533 = vunpack.c.h.b16 %v1355
    %v1534 = vunpack.c.l.b16 %v1356
    %v1535 = vunpack.c.h.b16 %v1356
    %v1536 = vunpack.c.l.b16 %v1357
    %v1537 = vunpack.c.h.b16 %v1357
    %v1538 = vunpack.c.l.b16 %v1358
    %v1539 = vunpack.c.h.b16 %v1358
    %v1540 = vunpack.c.l.b16 %v1359
    %v1541 = vunpack.c.h.b16 %v1359
    %v1542 = vunpack.c.l.b16 %v1360
    %v1543 = vunpack.c.h.b16 %v1360
    %v1544 = vunpack.c.l.b16 %v1361
    %v1545 = vunpack.c.h.b16 %v1361
    %v1546 = vunpack.c.l.b16 %v1362
    %v1547 = vunpack.c.h.b16 %v1362
    %v1548 = vunpack.c.l.b16 %v1363
    %v1549 = vunpack.c.h.b16 %v1363
    %v1550 = vunpack.c.l.b16 %v1364
    %v1551 = vunpack.c.h.b16 %v1364
    %v1552 = vunpack.c.l.b16 %v1365
    %v1553 = vunpack.c.h.b16 %v1365
    %v1554 = vunpack.c.l.b16 %v1366
    %v1555 = vunpack.c.h.b16 %v1366
    %v1556 = vunpack.c.l.b16 %v1367
    %v1557 = vunpack.c.h.b16 %v1367
    %v1558 = vunpack.c.l.b16 %v1368
    %v1559 = vunpack.c.h.b16 %v1368
    %v1560 = vunpack.c.l.b16 %v1369
    %v1561 = vunpack.c.h.b16 %v1369
    %v1562 = vunpack.c.l.b16 %v1370
    %v1563 = vunpack.c.h.b16 %v1370
    %v1564 = vunpack.c.l.b16 %v1371
    %v1565 = vunpack.c.h.b16 %v1371
    %v1566 = vunpack.c.l.b16 %v1372
    %v1567 = vunpack.c.h.b16 %v1372
    %v1568 = vunpack.c.l.b16 %v1373
    %v1569 = vunpack.c.h.b16 %v1373
    %v1570 = vunpack.c.l.b16 %v1374
    %v1571 = vunpack.c.h.b16 %v1374
    %v1572 = vpack.c.b16 %v1446, %v1444
    %v1573 = vpack.c.b16 %v1447, %v1445
    %v1574 = vpack.c.b16 %v1450, %v1448
    %v1575 = vpack.c.b16 %v1451, %v1449
    %v1576 = vpack.c.b16 %v1454, %v1452
    %v1577 = vpack.c.b16 %v1455, %v1453
    %v1578 = vpack.c.b16 %v1458, %v1456
    %v1579 = vpack.c.b16 %v1459, %v1457
    %v1580 = vpack.c.b16 %v1462, %v1460
    %v1581 = vpack.c.b16 %v1463, %v1461
    %v1582 = vpack.c.b16 %v1466, %v1464
    %v1583 = vpack.c.b16 %v1467, %v1465
    %v1584 = vpack.c.b16 %v1470, %v1468
    %v1585 = vpack.c.b16 %v1471, %v1469
    %v1586 = vpack.c.b16 %v1474, %v1472
    %v1587 = vpack.c.b16 %v1475, %v1473
    %v1588 = vpack.c.b16 %v1478, %v1476
    %v1589 = vpack.c.b16 %v1479, %v1477
    %v1590 = vpack.c.b16 %v1482, %v1480
    %v1591 = vpack.c.b16 %v1483, %v1481
    %v1592 = vpack.c.b16 %v1486, %v1484
    %v1593 = vpack.c.b16 %v1487, %v1485
    %v1594 = vpack.c.b16 %v1490, %v1488
    %v1595 = vpack.c.b16 %v1491, %v1489
    %v1596 = vpack.c.b16 %v1494, %v1492
    %v1597 = vpack.c.b16 %v1495, %v1493
    %v1598 = vpack.c.b16 %v1498, %v1496
    %v1599 = vpack.c.b16 %v1499, %v1497
    %v1600 = vpack.c.b16 %v1502, %v1500
    %v1601 = vpack.c.b16 %v1503, %v1501
    %v1602 = vpack.c.b16 %v1506, %v1504
    %v1603 = vpack.c.b16 %v1507, %v1505
    %v1604 = vpack.c.b16 %v1510, %v1508
    %v1605 = vpack.c.b16 %v1511, %v1509
    %v1606 = vpack.c.b16 %v1514, %v1512
    %v1607 = vpack.c.b16 %v1515, %v1513
    %v1608 = vpack.c.b16 %v1518, %v1516
    %v1609 = vpack.c.b16 %v1519, %v1517
    %v1610 = vpack.c.b16 %v1522, %v1520
    %v1611 = vpack.c.b16 %v1523, %v1521
    %v1612 = vpack.c.b16 %v1526, %v1524
    %v1613 = vpack.c.b16 %v1527, %v1525
    %v1614 = vpack.c.b16 %v1530, %v1528
    %v1615 = vpack.c.b16 %v1531, %v1529
    %v1616 = vpack.c.b16 %v1534, %v1532
    %v1617 = vpack.c.b16 %v1535, %v1533
    %v1618 = vpack.c.b16 %v1538, %v1536
    %v1619 = vpack.c.b16 %v1539, %v1537
    %v1620 = vpack.c.b16 %v1542, %v1540
    %v1621 = vpack.c.b16 %v1543, %v1541
    %v1622 = vpack.c.b16 %v1546, %v1544
    %v1623 = vpack.c.b16 %v1547, %v1545
    %v1624 = vpack.c.b16 %v1550, %v1548
    %v1625 = vpack.c.b16 %v1551, %v1549
    %v1626 = vpack.c.b16 %v1554, %v1552
    %v1627 = vpack.c.b16 %v1555, %v1553
    %v1628 = vpack.c.b16 %v1558, %v1556
    %v1629 = vpack.c.b16 %v1559, %v1557
    %v1630 = vpack.c.b16 %v1562, %v1560
    %v1631 = vpack.c.b16 %v1563, %v1561
    %v1632 = vpack.c.b16 %v1566, %v1564
    %v1633 = vpack.c.b16 %v1567, %v1565
    %v1634 = vpack.c.b16 %v1570, %v1568
    %v1635 = vpack.c.b16 %v1571, %v1569
    %1700 = vmatpush.bf16.msra.mxu0 %v1586
    %1701 = vmatpush.bf16.msra.mxu0 %v1584
    %1702 = vmatpush.bf16.msra.mxu0 %v1582
    %1703 = vmatpush.bf16.msra.mxu0 %v1580
    %1704 = vmatpush.bf16.msra.mxu0 %v1578
    %1705 = vmatpush.bf16.msra.mxu0 %v1576
    %1706 = vmatpush.bf16.msra.mxu0 %v1574
    %1707 = vmatpush.bf16.msra.mxu0 %v1572
    %1708 = vmatmul.bf16.gmra.mxu0 %v1307
    %v1709 = vpop.f32.mrf.mxu0
    %v1710 = vadd.f32 %v1376, %v1709
    %v1711 = vpop.f32.mrf.mxu0
    %1712 = vdwg.mxu0
    %1713 = vmatpush.bf16.msra.mxu0 %v1602
    %1714 = vmatpush.bf16.msra.mxu0 %v1600
    %1715 = vmatpush.bf16.msra.mxu0 %v1598
    %1716 = vmatpush.bf16.msra.mxu0 %v1596
    %1717 = vmatpush.bf16.msra.mxu0 %v1594
    %1718 = vmatpush.bf16.msra.mxu0 %v1592
    %1719 = vmatpush.bf16.msra.mxu0 %v1590
    %1720 = vmatpush.bf16.msra.mxu0 %v1588
    %1721 = vmatmul.bf16.gmra.mxu0 %v1308
    %v1722 = vpop.f32.mrf.mxu0
    %v1723 = vadd.f32 %v1710, %v1722
    %v1724 = vpop.f32.mrf.mxu0
    %1725 = vdwg.mxu0
    %1726 = vmatpush.bf16.msra.mxu0 %v1618
    %1727 = vmatpush.bf16.msra.mxu0 %v1616
    %1728 = vmatpush.bf16.msra.mxu0 %v1614
    %1729 = vmatpush.bf16.msra.mxu0 %v1612
    %1730 = vmatpush.bf16.msra.mxu0 %v1610
    %1731 = vmatpush.bf16.msra.mxu0 %v1608
    %1732 = vmatpush.bf16.msra.mxu0 %v1606
    %1733 = vmatpush.bf16.msra.mxu0 %v1604
    %1734 = vmatmul.bf16.gmra.mxu0 %v1309
    %v1735 = vpop.f32.mrf.mxu0
    %v1736 = vadd.f32 %v1723, %v1735
    %v1737 = vpop.f32.mrf.mxu0
    %1738 = vdwg.mxu0
    %1739 = vmatpush.bf16.msra.mxu0 %v1634
    %1740 = vmatpush.bf16.msra.mxu0 %v1632
    %1741 = vmatpush.bf16.msra.mxu0 %v1630
    %1742 = vmatpush.bf16.msra.mxu0 %v1628
    %1743 = vmatpush.bf16.msra.mxu0 %v1626
    %1744 = vmatpush.bf16.msra.mxu0 %v1624
    %1745 = vmatpush.bf16.msra.mxu0 %v1622
    %1746 = vmatpush.bf16.msra.mxu0 %v1620
    %1747 = vmatmul.bf16.gmra.mxu0 %v1310
    %v1748 = vpop.f32.mrf.mxu0
    %v1749 = vadd.f32 %v1736, %v1748
    %v1750 = vpop.f32.mrf.mxu0
    %1751 = vdwg.mxu0
    %1752 = vmatpush.bf16.msra.mxu0 %v1587
    %1753 = vmatpush.bf16.msra.mxu0 %v1585
    %1754 = vmatpush.bf16.msra.mxu0 %v1583
    %1755 = vmatpush.bf16.msra.mxu0 %v1581
    %1756 = vmatpush.bf16.msra.mxu0 %v1579
    %1757 = vmatpush.bf16.msra.mxu0 %v1577
    %1758 = vmatpush.bf16.msra.mxu0 %v1575
    %1759 = vmatpush.bf16.msra.mxu0 %v1573
    %1760 = vmatmul.bf16.gmra.mxu0 %v1307
    %v1761 = vpop.f32.mrf.mxu0
    %v1762 = vadd.f32 %v1377, %v1761
    %v1763 = vpop.f32.mrf.mxu0
    %1764 = vdwg.mxu0
    %1765 = vmatpush.bf16.msra.mxu0 %v1603
    %1766 = vmatpush.bf16.msra.mxu0 %v1601
    %1767 = vmatpush.bf16.msra.mxu0 %v1599
    %1768 = vmatpush.bf16.msra.mxu0 %v1597
    %1769 = vmatpush.bf16.msra.mxu0 %v1595
    %1770 = vmatpush.bf16.msra.mxu0 %v1593
    %1771 = vmatpush.bf16.msra.mxu0 %v1591
    %1772 = vmatpush.bf16.msra.mxu0 %v1589
    %1773 = vmatmul.bf16.gmra.mxu0 %v1308
    %v1774 = vpop.f32.mrf.mxu0
    %v1775 = vadd.f32 %v1762, %v1774
    %v1776 = vpop.f32.mrf.mxu0
    %1777 = vdwg.mxu0
    %1778 = vmatpush.bf16.msra.mxu0 %v1619
    %1779 = vmatpush.bf16.msra.mxu0 %v1617
    %1780 = vmatpush.bf16.msra.mxu0 %v1615
    %1781 = vmatpush.bf16.msra.mxu0 %v1613
    %1782 = vmatpush.bf16.msra.mxu0 %v1611
    %1783 = vmatpush.bf16.msra.mxu0 %v1609
    %1784 = vmatpush.bf16.msra.mxu0 %v1607
    %1785 = vmatpush.bf16.msra.mxu0 %v1605
    %1786 = vmatmul.bf16.gmra.mxu0 %v1309
    %v1787 = vpop.f32.mrf.mxu0
    %v1788 = vadd.f32 %v1775, %v1787
    %v1789 = vpop.f32.mrf.mxu0
    %1790 = vdwg.mxu0
    %1791 = vmatpush.bf16.msra.mxu0 %v1635
    %1792 = vmatpush.bf16.msra.mxu0 %v1633
    %1793 = vmatpush.bf16.msra.mxu0 %v1631
    %1794 = vmatpush.bf16.msra.mxu0 %v1629
    %1795 = vmatpush.bf16.msra.mxu0 %v1627
    %1796 = vmatpush.bf16.msra.mxu0 %v1625
    %1797 = vmatpush.bf16.msra.mxu0 %v1623
    %1798 = vmatpush.bf16.msra.mxu0 %v1621
    %1799 = vmatmul.bf16.gmra.mxu0 %v1310
    %v1800 = vpop.f32.mrf.mxu0
    %v1801 = vadd.f32 %v1788, %v1800
    %v1802 = vpop.f32.mrf.mxu0
    %1803 = vdwg.mxu0
    %v1804 = vadd.f32 %v1749, %v1801
    %1805 = vadd.xlane.f32.xlu0 %v1804
    %v1806 = vpop.xlane.xlu0 %1805
    %v1807 = vrcp.pop 256.0
    %v1808 = vmul.f32 256.0, %v1807
    %v1809 = vsub.f32 1.0, %v1808
    %v1810 = vmul.f32 %v1807, %v1809
    %v1811 = vadd.f32 %v1807, %v1810
    %vm1812 = vweird.f32 %v1807
    %v1813 = vsel %vm1812, %v1807, %v1811
    %v1814 = vmul.f32 %v1806, %v1813
    %v1815 = vsub.f32 %v1749, %v1814
    %v1816 = vsub.f32 %v1801, %v1814
    %v1817 = vmul.f32 %v1815, %v1815
    %v1818 = vmul.f32 %v1816, %v1816
    %v1819 = vadd.f32 %v1817, %v1818
    %1820 = vadd.xlane.f32.xlu0 %v1819
    %v1821 = vpop.xlane.xlu0 %1820
    %v1822 = vmul.f32 %v1821, %v1813
    %v1823 = vadd.f32 %v1822, 1e-05
    %v1824 = vrsqrt.pop %v1823
    %v1825 = vmul.f32 %v1824, %v1823
    %v1826 = vmul.f32 %v1825, %v1824
    %v1827 = vmul.f32 0.5, %v1826
    %v1828 = vsub.f32 1.5, %v1827
    %v1829 = vmul.f32 %v1824, %v1828
    %vm1830 = vweird.f32 %v1823
    %vm1831 = vweird.f32 %v1824
    %vm1832 = vmor %vm1830, %vm1831
    %v1833 = vsel %vm1832, %v1824, %v1829
    %v1834 = vmul.f32 %v1815, %v1833
    %v1835 = vmul.f32 %v1816, %v1833
    %v1837 = vperm.slane %v63, 0
    %v1838 = vperm.slane %v63, 1
    %v1841 = vmul.f32 %v1834, %v1837
    %v1842 = vmul.f32 %v1835, %v1838
    %v1844 = vperm.slane %v64, 0
    %v1845 = vperm.slane %v64, 1
    %v1848 = vadd.f32 %v1841, %v1844
    %v1849 = vadd.f32 %v1842, %v1845
    %v1850 = vmax.f32 %v1848, 0.0
    %v1851 = vmax.f32 %v1849, 0.0
    %v1852 = vpack.c.bf16 %v1850, %v1850
    %v1853 = vpack.c.bf16 %v1851, %v1851
    %v1854 = vld [vmem:[%s4] sm:$0xf]
    %v1855 = vld [vmem:[%s4 + $0x4] sm:$0xf]
    %v1856 = vld [vmem:[%s4 + $0x8] sm:$0xf]
    %v1857 = vld [vmem:[%s4 + $0xc] sm:$0xf]
    %v1858 = vld [vmem:[%s4 + $0x10] sm:$0xf]
    %v1859 = vld [vmem:[%s4 + $0x14] sm:$0xf]
    %v1860 = vld [vmem:[%s4 + $0x18] sm:$0xf]
    %v1861 = vld [vmem:[%s4 + $0x1c] sm:$0xf]
    %v1862 = vld [vmem:[%s4 + $0x20] sm:$0xf]
    %v1863 = vld [vmem:[%s4 + $0x24] sm:$0xf]
    %v1864 = vld [vmem:[%s4 + $0x28] sm:$0xf]
    %v1865 = vld [vmem:[%s4 + $0x2c] sm:$0xf]
    %v1866 = vld [vmem:[%s4 + $0x30] sm:$0xf]
    %v1867 = vld [vmem:[%s4 + $0x34] sm:$0xf]
    %v1868 = vld [vmem:[%s4 + $0x38] sm:$0xf]
    %v1869 = vld [vmem:[%s4 + $0x3c] sm:$0xf]
    %v1870 = vld [vmem:[%s4 + $0x40] sm:$0xf]
    %v1871 = vld [vmem:[%s4 + $0x44] sm:$0xf]
    %v1872 = vld [vmem:[%s4 + $0x48] sm:$0xf]
    %v1873 = vld [vmem:[%s4 + $0x4c] sm:$0xf]
    %v1874 = vld [vmem:[%s4 + $0x50] sm:$0xf]
    %v1875 = vld [vmem:[%s4 + $0x54] sm:$0xf]
    %v1876 = vld [vmem:[%s4 + $0x58] sm:$0xf]
    %v1877 = vld [vmem:[%s4 + $0x5c] sm:$0xf]
    %v1878 = vld [vmem:[%s4 + $0x60] sm:$0xf]
    %v1879 = vld [vmem:[%s4 + $0x64] sm:$0xf]
    %v1880 = vld [vmem:[%s4 + $0x68] sm:$0xf]
    %v1881 = vld [vmem:[%s4 + $0x6c] sm:$0xf]
    %v1882 = vld [vmem:[%s4 + $0x70] sm:$0xf]
    %v1883 = vld [vmem:[%s4 + $0x74] sm:$0xf]
    %v1884 = vld [vmem:[%s4 + $0x78] sm:$0xf]
    %v1885 = vld [vmem:[%s4 + $0x7c] sm:$0xf]
    %v1887 = vperm.slane %v65, 0
    %v1921 = vunpack.c.l.b16 %v1854
    %v1922 = vunpack.c.l.b16 %v1855
    %v1923 = vunpack.c.l.b16 %v1856
    %v1924 = vunpack.c.l.b16 %v1857
    %v1925 = vunpack.c.l.b16 %v1858
    %v1926 = vunpack.c.l.b16 %v1859
    %v1927 = vunpack.c.l.b16 %v1860
    %v1928 = vunpack.c.l.b16 %v1861
    %v1929 = vunpack.c.l.b16 %v1862
    %v1930 = vunpack.c.l.b16 %v1863
    %v1931 = vunpack.c.l.b16 %v1864
    %v1932 = vunpack.c.l.b16 %v1865
    %v1933 = vunpack.c.l.b16 %v1866
    %v1934 = vunpack.c.l.b16 %v1867
    %v1935 = vunpack.c.l.b16 %v1868
    %v1936 = vunpack.c.l.b16 %v1869
    %v1937 = vunpack.c.l.b16 %v1870
    %v1938 = vunpack.c.l.b16 %v1871
    %v1939 = vunpack.c.l.b16 %v1872
    %v1940 = vunpack.c.l.b16 %v1873
    %v1941 = vunpack.c.l.b16 %v1874
    %v1942 = vunpack.c.l.b16 %v1875
    %v1943 = vunpack.c.l.b16 %v1876
    %v1944 = vunpack.c.l.b16 %v1877
    %v1945 = vunpack.c.l.b16 %v1878
    %v1946 = vunpack.c.l.b16 %v1879
    %v1947 = vunpack.c.l.b16 %v1880
    %v1948 = vunpack.c.l.b16 %v1881
    %v1949 = vunpack.c.l.b16 %v1882
    %v1950 = vunpack.c.l.b16 %v1883
    %v1951 = vunpack.c.l.b16 %v1884
    %v1952 = vunpack.c.l.b16 %v1885
    %v1953 = vpack.c.b16 %v1922, %v1921
    %v1954 = vpack.c.b16 %v1924, %v1923
    %v1955 = vpack.c.b16 %v1926, %v1925
    %v1956 = vpack.c.b16 %v1928, %v1927
    %v1957 = vpack.c.b16 %v1930, %v1929
    %v1958 = vpack.c.b16 %v1932, %v1931
    %v1959 = vpack.c.b16 %v1934, %v1933
    %v1960 = vpack.c.b16 %v1936, %v1935
    %v1961 = vpack.c.b16 %v1938, %v1937
    %v1962 = vpack.c.b16 %v1940, %v1939
    %v1963 = vpack.c.b16 %v1942, %v1941
    %v1964 = vpack.c.b16 %v1944, %v1943
    %v1965 = vpack.c.b16 %v1946, %v1945
    %v1966 = vpack.c.b16 %v1948, %v1947
    %v1967 = vpack.c.b16 %v1950, %v1949
    %v1968 = vpack.c.b16 %v1952, %v1951
    %1985 = vmatpush.bf16.msra.mxu0 %v1960
    %1986 = vmatpush.bf16.msra.mxu0 %v1959
    %1987 = vmatpush.bf16.msra.mxu0 %v1958
    %1988 = vmatpush.bf16.msra.mxu0 %v1957
    %1989 = vmatpush.bf16.msra.mxu0 %v1956
    %1990 = vmatpush.bf16.msra.mxu0 %v1955
    %1991 = vmatpush.bf16.msra.mxu0 %v1954
    %1992 = vmatpush.bf16.msra.mxu0 %v1953
    %1993 = vmatmul.bf16.gmra.mxu0 %v1852
    %v1994 = vpop.f32.mrf.mxu0
    %v1995 = vadd.f32 %v1887, %v1994
    %v1996 = vpop.f32.mrf.mxu0
    %1997 = vdwg.mxu0
    %1998 = vmatpush.bf16.msra.mxu0 %v1968
    %1999 = vmatpush.bf16.msra.mxu0 %v1967
    %2000 = vmatpush.bf16.msra.mxu0 %v1966
    %2001 = vmatpush.bf16.msra.mxu0 %v1965
    %2002 = vmatpush.bf16.msra.mxu0 %v1964
    %2003 = vmatpush.bf16.msra.mxu0 %v1963
    %2004 = vmatpush.bf16.msra.mxu0 %v1962
    %2005 = vmatpush.bf16.msra.mxu0 %v1961
    %2006 = vmatmul.bf16.gmra.mxu0 %v1853
    %v2007 = vpop.f32.mrf.mxu0
    %v2008 = vadd.f32 %v1995, %v2007
    %v2009 = vpop.f32.mrf.mxu0
    %2010 = vdwg.mxu0
    %v2011 = vtanh.pop %v2008
    %vm2012 = vcmask 64512
    %2013 = vst.msk [vmem:[%s6] sm:$0xff] %vm2012, %v2011
    // Predicated region
    $region34: #{actor_forward.1} parent=1 // pred_check
      _
    $region35: #{actor_forward.1} parent=1 // pred_check_branch
      %2015 = sbr.rel (0) target = $region37
    $region36: #{actor_forward.1} parent=1 // pred_region
      _
    $region37: #{actor_forward.1} parent=1 // pred_fallthru
      _
    // Predicated region
    $region38: #{actor_forward.1} parent=1 // pred_check
      _
    $region39: #{actor_forward.1} parent=1 // pred_check_branch
      %2017 = sbr.rel (0) target = $region41
    $region40: #{actor_forward.1} parent=1 // pred_region
      _
    $region41: #{actor_forward.1} parent=1 // pred_fallthru
      _
    %2018 = vsyncpa [#allocation3], 1
    %2019 = vsyncpa [#allocation5], 1

</llo_original>
